<compile_context>
chip_gen: v7x
topology: tpu7x:2x2x1
jax: 0.10.0
libtpu: 0.0.40
codegen_flags: <defaults>
</compile_context>

<pallas_src>
import numpy as np
import jax
import jax.numpy as jnp
from jax import lax
from jax.experimental import pallas as pl
from jax.experimental.pallas import tpu as pltpu

# ----------------------------- model dims -----------------------------------
D_MODEL = 32
NHEAD = 4
HEAD_DIM = D_MODEL // NHEAD
DIM_FF = 16
SCALE = 1.0 / float(np.sqrt(HEAD_DIM))

SEQ_L = 8   # target sequence length
SEQ_S = 8   # memory sequence length
BATCH = 2


# ----------------------------- Pallas kernel --------------------------------
def _make_kernel(E, H):
    """Kernel closure over the embedding width / head count (static)."""

    def attn(q_src, kv_src, head_mask, score_bias, w_qkv, b_q, w_o, b_o):
        # w_qkv: (E, 3E) = [Wq*scale | Wk | Wv]   (key/value biases handled at pack time)
        proj_q = jnp.dot(q_src, w_qkv, preferred_element_type=jnp.float32)      # (Rq, 3E)
        if q_src is kv_src:                       # self-attention: single projection pass
            proj_kv = proj_q
        else:                                     # cross-attention
            proj_kv = jnp.dot(kv_src, w_qkv, preferred_element_type=jnp.float32)

        q = proj_q[:, 0:E] + b_q                  # (Rq, E), lane offset 0
        k = proj_kv[:, E:2 * E]                   # (Rk, E)
        v = proj_kv[:, 2 * E:3 * E]               # (Rk, E)

        # Head-expanded K / V along sublanes: block h keeps only head-h lanes.
        # head_mask[h*Rk + c, e] = 1.0 iff lane e belongs to head h (precomputed).
        k_exp = jnp.concatenate([k] * H, axis=0) * head_mask      # (H*Rk, E)
        v_exp = jnp.concatenate([v] * H, axis=0) * head_mask      # (H*Rk, E)

        # Per-head scores in one matmul, contracting dim 1 of both operands
        # (no explicit transpose is materialized).
        s = lax.dot_general(q, k_exp, (((1,), (1,)), ((), ())),
                            preferred_element_type=jnp.float32)   # (Rq, H*Rk)
        s = s + score_bias                        # 0 / -1e30 batch mask (precomputed)
        # Row-wide max is a constant shift per row, hence valid for every head segment.
        s = s - jnp.max(s, axis=-1, keepdims=True)
        p = jnp.exp(s)

        # Per-(row, head) softmax denominator broadcast to that head's lanes, and the
        # context, each as one matmul on the otherwise-idle MXU (no XLU row-sum).
        denom = jnp.dot(p, head_mask, preferred_element_type=jnp.float32)      # (Rq, E)
        ctx = jnp.dot(p, v_exp, preferred_element_type=jnp.float32)            # (Rq, E)

        inv = pl.reciprocal(denom, approx=True)   # EUP slot
        inv = inv * (2.0 - denom * inv)           # one Newton step -> ~f32 accurate

        # Output projection (value bias already folded into b_o at pack time).
        return jnp.dot(ctx * inv, w_o, preferred_element_type=jnp.float32) + b_o

    def kernel(x_ref, m_ref,
               w1_ref, bq1_ref, wo1_ref, bo1_ref,      # self-attention params
               w2_ref, bq2_ref, wo2_ref, bo2_ref,      # cross-attention params
               wff_ref, bff_ref,                        # folded feed-forward
               hm1_ref, sb1_ref, hm2_ref, sb2_ref,      # precomputed masks
               out_ref):
        x = x_ref[...].astype(jnp.float32)              # (L*N, E)
        m = m_ref[...].astype(jnp.float32)              # (S*N, E)

        # 1) self-attention + residual
        x = x + attn(x, x, hm1_ref[...], sb1_ref[...],
                     w1_ref[...], bq1_ref[...], wo1_ref[...], bo1_ref[...])
        # 2) cross-attention + residual
        x = x + attn(x, m, hm2_ref[...], sb2_ref[...],
                     w2_ref[...], bq2_ref[...], wo2_ref[...], bo2_ref[...])
        # 3) feed-forward + residual (LeakyReLU slope 1.0 == identity, so the two
        #    linears were composed into a single affine map on the host).
        x = x + (jnp.dot(x, wff_ref[...], preferred_element_type=jnp.float32)
                 + bff_ref[...])
        out_ref[...] = x.astype(out_ref.dtype)

    return kernel


# ----------------------------- wrapper ---------------------------------------
@jax.jit
def transformer_decoder_layer(tgt, memory, packed):
    """tgt: (L, N, E), memory: (S, N, E)  ->  (L, N, E)."""
    L, N, E = tgt.shape
    S = memory.shape[0]

    # Contiguous reshapes (free): batch folded into the sublane axis, row r = l*N + n.
    x = tgt.reshape(L * N, E)
    m = memory.reshape(S * N, E)

    operands = (x, m) + tuple(packed)
    kernel = _make_kernel(E, NHEAD)

    out = pl.pallas_call(
        kernel,
        out_shape=jax.ShapeDtypeStruct((L * N, E), tgt.dtype),
        in_specs=[pl.BlockSpec(memory_space=pltpu.MemorySpace.VMEM)
                  for _ in operands],
        out_specs=pl.BlockSpec(memory_space=pltpu.MemorySpace.VMEM),
    )(*operands)

    return out.reshape(L, N, E)


# ----------------------------- param init / packing --------------------------
def init_params(key):
    """Raw parameters in PyTorch conventions (Linear: y = x @ W.T + b)."""
    ks = jax.random.split(key, 12)
    sc = 0.1

    def attn(k0, k1, k2, k3):
        return {
            "in_w":  sc * jax.random.normal(k0, (3 * D_MODEL, D_MODEL), jnp.float32),
            "in_b":  sc * jax.random.normal(k1, (3 * D_MODEL,), jnp.float32),
            "out_w": sc * jax.random.normal(k2, (D_MODEL, D_MODEL), jnp.float32),
            "out_b": sc * jax.random.normal(k3, (D_MODEL,), jnp.float32),
        }

    return {
        "attn1": attn(*ks[0:4]),
        "attn2": attn(*ks[4:8]),
        "lin1_w": sc * jax.random.normal(ks[8], (DIM_FF, D_MODEL), jnp.float32),
        "lin1_b": sc * jax.random.normal(ks[9], (DIM_FF,), jnp.float32),
        "lin2_w": sc * jax.random.normal(ks[10], (D_MODEL, DIM_FF), jnp.float32),
        "lin2_b": sc * jax.random.normal(ks[11], (D_MODEL,), jnp.float32),
    }


def pack_params(raw, L, S, N):
    """Host-side packing: folds scale / biases / FF composition and precomputes masks."""
    E, H, hd = D_MODEL, NHEAD, HEAD_DIM
    f64 = lambda a: np.asarray(a, dtype=np.float64)

    def pack_attn(p):
        in_w, in_b = f64(p["in_w"]), f64(p["in_b"])
        out_w, out_b = f64(p["out_w"]), f64(p["out_b"])
        wq, wk, wv = np.split(in_w, 3, axis=0)          # each (E, E)
        bq, bk, bv = np.split(in_b, 3)
        del bk  # key bias adds a per-(row, head) constant to scores -> cancels in softmax
        w_qkv = np.concatenate([wq.T * SCALE, wk.T, wv.T], axis=1)      # (E, 3E)
        b_q = (bq * SCALE).reshape(1, E)
        w_o = out_w.T                                                    # (E, E)
        b_o = (bv @ out_w.T + out_b).reshape(1, E)      # value bias folded through Wo
        return (w_qkv.astype(np.float32), b_q.astype(np.float32),
                w_o.astype(np.float32), b_o.astype(np.float32))

    a1 = pack_attn(raw["attn1"])
    a2 = pack_attn(raw["attn2"])

    # LeakyReLU(negative_slope=1.0) == identity -> compose the two FF linears exactly.
    # TODO(synk): if the model ever uses a real negative_slope, revert to
    # linear1 -> leaky_relu -> linear2 inside the kernel.
    w1, b1 = f64(raw["lin1_w"]), f64(raw["lin1_b"])
    w2, b2 = f64(raw["lin2_w"]), f64(raw["lin2_b"])
    w_ff = (w1.T @ w2.T).astype(np.float32)                              # (E, E)
    b_ff = (b1 @ w2.T + b2).reshape(1, E).astype(np.float32)

    def masks(Rq, Rk):
        j = np.arange(H * Rk)
        # head_mask[h*Rk + c, e] = 1.0 iff lane e belongs to head h
        head_mask = (np.arange(E)[None, :] // hd == (j[:, None] // Rk)).astype(np.float32)
        # score_bias[r, j] = 0 if query row r and key column j are in the same batch
        r = np.arange(Rq)
        score_bias = np.where((r[:, None] % N) == (j[None, :] % N),
                              0.0, -1e30).astype(np.float32)
        return head_mask, score_bias

    hm1, sb1 = masks(L * N, L * N)     # self-attention (keys = tgt)
    hm2, sb2 = masks(L * N, S * N)     # cross-attention (keys = memory)

    return a1 + a2 + (w_ff, b_ff, hm1, sb1, hm2, sb2)


# ----------------------------- pure-JAX reference ----------------------------
def reference(tgt, memory, raw):
    def mha(q_in, kv_in, p):
        wq, wk, wv = jnp.split(p["in_w"], 3, axis=0)
        bq, bk, bv = jnp.split(p["in_b"], 3)
        q = q_in @ wq.T + bq
        k = kv_in @ wk.T + bk
        v = kv_in @ wv.T + bv
        L, N, E = q.shape
        S = k.shape[0]
        qh = q.reshape(L, N, NHEAD, HEAD_DIM) * SCALE
        kh = k.reshape(S, N, NHEAD, HEAD_DIM)
        vh = v.reshape(S, N, NHEAD, HEAD_DIM)
        s = jnp.einsum('lnhd,snhd->nhls', qh, kh)
        pr = jax.nn.softmax(s, axis=-1)
        o = jnp.einsum('nhls,snhd->lnhd', pr, vh).reshape(L, N, E)
        return o @ p["out_w"].T + p["out_b"]

    x = tgt + mha(tgt, tgt, raw["attn1"])
    x = x + mha(x, memory, raw["attn2"])
    h1 = x @ raw["lin1_w"].T + raw["lin1_b"]   # LeakyReLU(slope=1.0) == identity
    return x + (h1 @ raw["lin2_w"].T + raw["lin2_b"])


# ----------------------------- main -------------------------------------------
if __name__ == "__main__":
    key = jax.random.PRNGKey(0)
    k_tgt, k_mem, k_par = jax.random.split(key, 3)

    tgt = jax.random.normal(k_tgt, (SEQ_L, BATCH, D_MODEL), jnp.float32)
    memory = jax.random.normal(k_mem, (SEQ_S, BATCH, D_MODEL), jnp.float32)
    raw = init_params(k_par)
    packed = pack_params(raw, SEQ_L, SEQ_S, BATCH)

    out = transformer_decoder_layer(tgt, memory, packed)
    out = jax.block_until_ready(out)

    # Full-precision reference so the comparison only sees kernel error (~1e-5).
    with jax.default_matmul_precision("highest"):
        ref = reference(tgt, memory, raw)

    assert out.shape == (SEQ_L, BATCH, D_MODEL)
    assert jnp.allclose(out, ref, atol=1e-3, rtol=1e-3), "mismatch vs reference"

    print("KERNEL_OK")
</pallas_src>

<mosaic_0001>
module attributes {stable_mosaic.version = 11 : i64} {
  func.func @kernel(%arg0: memref<16x32xf32, #tpu.memory_space<vmem>>, %arg1: memref<16x32xf32, #tpu.memory_space<vmem>>, %arg2: memref<32x96xf32, #tpu.memory_space<vmem>>, %arg3: memref<1x32xf32, #tpu.memory_space<vmem>>, %arg4: memref<32x32xf32, #tpu.memory_space<vmem>>, %arg5: memref<1x32xf32, #tpu.memory_space<vmem>>, %arg6: memref<32x96xf32, #tpu.memory_space<vmem>>, %arg7: memref<1x32xf32, #tpu.memory_space<vmem>>, %arg8: memref<32x32xf32, #tpu.memory_space<vmem>>, %arg9: memref<1x32xf32, #tpu.memory_space<vmem>>, %arg10: memref<32x32xf32, #tpu.memory_space<vmem>>, %arg11: memref<1x32xf32, #tpu.memory_space<vmem>>, %arg12: memref<64x32xf32, #tpu.memory_space<vmem>>, %arg13: memref<16x64xf32, #tpu.memory_space<vmem>>, %arg14: memref<64x32xf32, #tpu.memory_space<vmem>>, %arg15: memref<16x64xf32, #tpu.memory_space<vmem>>, %arg16: memref<16x32xf32, #tpu.memory_space<vmem>>) attributes {dimension_semantics = [], scalar_prefetch = 0 : i64, scratch_operands = 0 : i64, tpu.core_type = #tpu.core_type<tc>} {
    %c0 = arith.constant 0 : index
    %c0_0 = arith.constant 0 : index
    %0 = vector.load %arg0[%c0, %c0_0] : memref<16x32xf32, #tpu.memory_space<vmem>>, vector<16x32xf32>
    %c0_1 = arith.constant 0 : index
    %c0_2 = arith.constant 0 : index
    %1 = vector.load %arg1[%c0_1, %c0_2] : memref<16x32xf32, #tpu.memory_space<vmem>>, vector<16x32xf32>
    %c0_3 = arith.constant 0 : index
    %c0_4 = arith.constant 0 : index
    %2 = vector.load %arg12[%c0_3, %c0_4] : memref<64x32xf32, #tpu.memory_space<vmem>>, vector<64x32xf32>
    %c0_5 = arith.constant 0 : index
    %c0_6 = arith.constant 0 : index
    %3 = vector.load %arg13[%c0_5, %c0_6] : memref<16x64xf32, #tpu.memory_space<vmem>>, vector<16x64xf32>
    %c0_7 = arith.constant 0 : index
    %c0_8 = arith.constant 0 : index
    %4 = vector.load %arg2[%c0_7, %c0_8] : memref<32x96xf32, #tpu.memory_space<vmem>>, vector<32x96xf32>
    %c0_9 = arith.constant 0 : index
    %c0_10 = arith.constant 0 : index
    %5 = vector.load %arg3[%c0_9, %c0_10] : memref<1x32xf32, #tpu.memory_space<vmem>>, vector<1x32xf32>
    %c0_11 = arith.constant 0 : index
    %c0_12 = arith.constant 0 : index
    %6 = vector.load %arg4[%c0_11, %c0_12] : memref<32x32xf32, #tpu.memory_space<vmem>>, vector<32x32xf32>
    %c0_13 = arith.constant 0 : index
    %c0_14 = arith.constant 0 : index
    %7 = vector.load %arg5[%c0_13, %c0_14] : memref<1x32xf32, #tpu.memory_space<vmem>>, vector<1x32xf32>
    %cst = arith.constant dense<0.000000e+00> : vector<16x96xf32>
    %8 = tpu.matmul %0, %4, %cst {dimension_numbers = #tpu.dot_dimension_numbers<[1], [0], [0], [1], [0, 0, 1, 1], [], []>} : vector<16x32xf32>, vector<32x96xf32>, vector<16x96xf32> -> vector<16x96xf32>
    %9 = vector.extract_strided_slice %8 {offsets = [0, 0], sizes = [16, 32], strides = [1, 1]} : vector<16x96xf32> to vector<16x32xf32>
    %10 = vector.broadcast %5 : vector<1x32xf32> to vector<16x32xf32>
    %11 = arith.addf %9, %10 : vector<16x32xf32>
    %12 = vector.extract_strided_slice %8 {offsets = [0, 32], sizes = [16, 32], strides = [1, 1]} : vector<16x96xf32> to vector<16x32xf32>
    %13 = vector.extract_strided_slice %8 {offsets = [0, 64], sizes = [16, 32], strides = [1, 1]} : vector<16x96xf32> to vector<16x32xf32>
    %14 = tpu.concatenate %12, %12, %12, %12 in 0 : vector<16x32xf32>, vector<16x32xf32>, vector<16x32xf32>, vector<16x32xf32> -> vector<64x32xf32>
    %15 = arith.mulf %14, %2 : vector<64x32xf32>
    %16 = tpu.concatenate %13, %13, %13, %13 in 0 : vector<16x32xf32>, vector<16x32xf32>, vector<16x32xf32>, vector<16x32xf32> -> vector<64x32xf32>
    %17 = arith.mulf %16, %2 : vector<64x32xf32>
    %cst_15 = arith.constant dense<0.000000e+00> : vector<16x64xf32>
    %18 = tpu.matmul %11, %15, %cst_15 {dimension_numbers = #tpu.dot_dimension_numbers<[1], [1], [0], [0], [0, 0, 1, 0], [], []>} : vector<16x32xf32>, vector<64x32xf32>, vector<16x64xf32> -> vector<16x64xf32>
    %19 = arith.addf %18, %3 : vector<16x64xf32>
    %cst_16 = arith.constant dense<0xFF800000> : vector<16xf32>
    %20 = vector.multi_reduction <maximumf>, %19, %cst_16 [1] : vector<16x64xf32> to vector<16xf32>
    %21 = vector.shape_cast %20 : vector<16xf32> to vector<16x1xf32>
    %22 = vector.broadcast %21 : vector<16x1xf32> to vector<16x64xf32>
    %23 = arith.subf %19, %22 : vector<16x64xf32>
    %24 = math.exp %23 : vector<16x64xf32>
    %cst_17 = arith.constant dense<0.000000e+00> : vector<16x32xf32>
    %25 = tpu.matmul %24, %2, %cst_17 {dimension_numbers = #tpu.dot_dimension_numbers<[1], [0], [0], [1], [0, 0, 1, 1], [], []>} : vector<16x64xf32>, vector<64x32xf32>, vector<16x32xf32> -> vector<16x32xf32>
    %cst_18 = arith.constant dense<0.000000e+00> : vector<16x32xf32>
    %26 = tpu.matmul %24, %17, %cst_18 {dimension_numbers = #tpu.dot_dimension_numbers<[1], [0], [0], [1], [0, 0, 1, 1], [], []>} : vector<16x64xf32>, vector<64x32xf32>, vector<16x32xf32> -> vector<16x32xf32>
    %27 = tpu.reciprocal %25 {approx = true} : vector<16x32xf32> -> vector<16x32xf32>
    %28 = arith.mulf %25, %27 : vector<16x32xf32>
    %cst_19 = arith.constant 2.000000e+00 : f32
    %29 = vector.broadcast %cst_19 : f32 to vector<16x32xf32>
    %30 = arith.subf %29, %28 : vector<16x32xf32>
    %31 = arith.mulf %27, %30 : vector<16x32xf32>
    %32 = arith.mulf %26, %31 : vector<16x32xf32>
    %cst_20 = arith.constant dense<0.000000e+00> : vector<16x32xf32>
    %33 = tpu.matmul %32, %6, %cst_20 {dimension_numbers = #tpu.dot_dimension_numbers<[1], [0], [0], [1], [0, 0, 1, 1], [], []>} : vector<16x32xf32>, vector<32x32xf32>, vector<16x32xf32> -> vector<16x32xf32>
    %34 = vector.broadcast %7 : vector<1x32xf32> to vector<16x32xf32>
    %35 = arith.addf %33, %34 : vector<16x32xf32>
    %36 = arith.addf %0, %35 : vector<16x32xf32>
    %c0_21 = arith.constant 0 : index
    %c0_22 = arith.constant 0 : index
    %37 = vector.load %arg14[%c0_21, %c0_22] : memref<64x32xf32, #tpu.memory_space<vmem>>, vector<64x32xf32>
    %c0_23 = arith.constant 0 : index
    %c0_24 = arith.constant 0 : index
    %38 = vector.load %arg15[%c0_23, %c0_24] : memref<16x64xf32, #tpu.memory_space<vmem>>, vector<16x64xf32>
    %c0_25 = arith.constant 0 : index
    %c0_26 = arith.constant 0 : index
    %39 = vector.load %arg6[%c0_25, %c0_26] : memref<32x96xf32, #tpu.memory_space<vmem>>, vector<32x96xf32>
    %c0_27 = arith.constant 0 : index
    %c0_28 = arith.constant 0 : index
    %40 = vector.load %arg7[%c0_27, %c0_28] : memref<1x32xf32, #tpu.memory_space<vmem>>, vector<1x32xf32>
    %c0_29 = arith.constant 0 : index
    %c0_30 = arith.constant 0 : index
    %41 = vector.load %arg8[%c0_29, %c0_30] : memref<32x32xf32, #tpu.memory_space<vmem>>, vector<32x32xf32>
    %c0_31 = arith.constant 0 : index
    %c0_32 = arith.constant 0 : index
    %42 = vector.load %arg9[%c0_31, %c0_32] : memref<1x32xf32, #tpu.memory_space<vmem>>, vector<1x32xf32>
    %cst_33 = arith.constant dense<0.000000e+00> : vector<16x96xf32>
    %43 = tpu.matmul %36, %39, %cst_33 {dimension_numbers = #tpu.dot_dimension_numbers<[1], [0], [0], [1], [0, 0, 1, 1], [], []>} : vector<16x32xf32>, vector<32x96xf32>, vector<16x96xf32> -> vector<16x96xf32>
    %cst_34 = arith.constant dense<0.000000e+00> : vector<16x96xf32>
    %44 = tpu.matmul %1, %39, %cst_34 {dimension_numbers = #tpu.dot_dimension_numbers<[1], [0], [0], [1], [0, 0, 1, 1], [], []>} : vector<16x32xf32>, vector<32x96xf32>, vector<16x96xf32> -> vector<16x96xf32>
    %45 = vector.extract_strided_slice %43 {offsets = [0, 0], sizes = [16, 32], strides = [1, 1]} : vector<16x96xf32> to vector<16x32xf32>
    %46 = vector.broadcast %40 : vector<1x32xf32> to vector<16x32xf32>
    %47 = arith.addf %45, %46 : vector<16x32xf32>
    %48 = vector.extract_strided_slice %44 {offsets = [0, 32], sizes = [16, 32], strides = [1, 1]} : vector<16x96xf32> to vector<16x32xf32>
    %49 = vector.extract_strided_slice %44 {offsets = [0, 64], sizes = [16, 32], strides = [1, 1]} : vector<16x96xf32> to vector<16x32xf32>
    %50 = tpu.concatenate %48, %48, %48, %48 in 0 : vector<16x32xf32>, vector<16x32xf32>, vector<16x32xf32>, vector<16x32xf32> -> vector<64x32xf32>
    %51 = arith.mulf %50, %37 : vector<64x32xf32>
    %52 = tpu.concatenate %49, %49, %49, %49 in 0 : vector<16x32xf32>, vector<16x32xf32>, vector<16x32xf32>, vector<16x32xf32> -> vector<64x32xf32>
    %53 = arith.mulf %52, %37 : vector<64x32xf32>
    %cst_35 = arith.constant dense<0.000000e+00> : vector<16x64xf32>
    %54 = tpu.matmul %47, %51, %cst_35 {dimension_numbers = #tpu.dot_dimension_numbers<[1], [1], [0], [0], [0, 0, 1, 0], [], []>} : vector<16x32xf32>, vector<64x32xf32>, vector<16x64xf32> -> vector<16x64xf32>
    %55 = arith.addf %54, %38 : vector<16x64xf32>
    %cst_36 = arith.constant dense<0xFF800000> : vector<16xf32>
    %56 = vector.multi_reduction <maximumf>, %55, %cst_36 [1] : vector<16x64xf32> to vector<16xf32>
    %57 = vector.shape_cast %56 : vector<16xf32> to vector<16x1xf32>
    %58 = vector.broadcast %57 : vector<16x1xf32> to vector<16x64xf32>
    %59 = arith.subf %55, %58 : vector<16x64xf32>
    %60 = math.exp %59 : vector<16x64xf32>
    %cst_37 = arith.constant dense<0.000000e+00> : vector<16x32xf32>
    %61 = tpu.matmul %60, %37, %cst_37 {dimension_numbers = #tpu.dot_dimension_numbers<[1], [0], [0], [1], [0, 0, 1, 1], [], []>} : vector<16x64xf32>, vector<64x32xf32>, vector<16x32xf32> -> vector<16x32xf32>
    %cst_38 = arith.constant dense<0.000000e+00> : vector<16x32xf32>
    %62 = tpu.matmul %60, %53, %cst_38 {dimension_numbers = #tpu.dot_dimension_numbers<[1], [0], [0], [1], [0, 0, 1, 1], [], []>} : vector<16x64xf32>, vector<64x32xf32>, vector<16x32xf32> -> vector<16x32xf32>
    %63 = tpu.reciprocal %61 {approx = true} : vector<16x32xf32> -> vector<16x32xf32>
    %64 = arith.mulf %61, %63 : vector<16x32xf32>
    %cst_39 = arith.constant 2.000000e+00 : f32
    %65 = vector.broadcast %cst_39 : f32 to vector<16x32xf32>
    %66 = arith.subf %65, %64 : vector<16x32xf32>
    %67 = arith.mulf %63, %66 : vector<16x32xf32>
    %68 = arith.mulf %62, %67 : vector<16x32xf32>
    %cst_40 = arith.constant dense<0.000000e+00> : vector<16x32xf32>
    %69 = tpu.matmul %68, %41, %cst_40 {dimension_numbers = #tpu.dot_dimension_numbers<[1], [0], [0], [1], [0, 0, 1, 1], [], []>} : vector<16x32xf32>, vector<32x32xf32>, vector<16x32xf32> -> vector<16x32xf32>
    %70 = vector.broadcast %42 : vector<1x32xf32> to vector<16x32xf32>
    %71 = arith.addf %69, %70 : vector<16x32xf32>
    %72 = arith.addf %36, %71 : vector<16x32xf32>
    %c0_41 = arith.constant 0 : index
    %c0_42 = arith.constant 0 : index
    %73 = vector.load %arg10[%c0_41, %c0_42] : memref<32x32xf32, #tpu.memory_space<vmem>>, vector<32x32xf32>
    %cst_43 = arith.constant dense<0.000000e+00> : vector<16x32xf32>
    %74 = tpu.matmul %72, %73, %cst_43 {dimension_numbers = #tpu.dot_dimension_numbers<[1], [0], [0], [1], [0, 0, 1, 1], [], []>} : vector<16x32xf32>, vector<32x32xf32>, vector<16x32xf32> -> vector<16x32xf32>
    %c0_44 = arith.constant 0 : index
    %c0_45 = arith.constant 0 : index
    %75 = vector.load %arg11[%c0_44, %c0_45] : memref<1x32xf32, #tpu.memory_space<vmem>>, vector<1x32xf32>
    %76 = vector.broadcast %75 : vector<1x32xf32> to vector<16x32xf32>
    %77 = arith.addf %74, %76 : vector<16x32xf32>
    %78 = arith.addf %72, %77 : vector<16x32xf32>
    %c0_46 = arith.constant 0 : index
    %c0_47 = arith.constant 0 : index
    %79 = vector.load %arg16[%c0_46, %c0_47] : memref<16x32xf32, #tpu.memory_space<vmem>>, vector<16x32xf32>
    tpu.vector_store %arg16[%c0_46, %c0_47], %78 {strides = array<i32>} : memref<16x32xf32, #tpu.memory_space<vmem>>, vector<16x32xf32>,
    return
  }
}

</mosaic_0001>

<llo_original>
// kernel: transformer_decoder_layer.1
$region0: #{transformer_decoder_layer.1}
  #allocation0 [shape = 'u32[]', space=smem, size = 0x4, offset = 0x4, fixed_abs, tag = 'smem constant byte address 0x4 - core index']
  #allocation1 [shape = 'u32[144,128]{1,0:T(1,128)}', space=vmem, size = 0x12000, scoped, tag = 'internal scratch']
  %s0 = inlined_call_operand.hbm [shape: f32[16,32], index: 0, kind: input, shape index: {}]
  %s1 = inlined_call_operand.hbm [shape: f32[16,32], index: 1, kind: input, shape index: {}]
  %s2 = inlined_call_operand.vmem [shape: f32[32,96], index: 2, kind: input, shape index: {}]
  %s3 = inlined_call_operand.hbm [shape: f32[1,32], index: 3, kind: input, shape index: {}]
  %s4 = inlined_call_operand.vmem [shape: f32[32,32], index: 4, kind: input, shape index: {}]
  %s5 = inlined_call_operand.hbm [shape: f32[1,32], index: 5, kind: input, shape index: {}]
  %s6 = inlined_call_operand.vmem [shape: f32[32,96], index: 6, kind: input, shape index: {}]
  %s7 = inlined_call_operand.hbm [shape: f32[1,32], index: 7, kind: input, shape index: {}]
  %s8 = inlined_call_operand.vmem [shape: f32[32,32], index: 8, kind: input, shape index: {}]
  %s9 = inlined_call_operand.hbm [shape: f32[1,32], index: 9, kind: input, shape index: {}]
  %s10 = inlined_call_operand.vmem [shape: f32[32,32], index: 10, kind: input, shape index: {}]
  %s11 = inlined_call_operand.hbm [shape: f32[1,32], index: 11, kind: input, shape index: {}]
  %s12 = inlined_call_operand.vmem [shape: f32[64,32], index: 12, kind: input, shape index: {}]
  %s13 = inlined_call_operand.vmem [shape: f32[16,64], index: 13, kind: input, shape index: {}]
  %s14 = inlined_call_operand.vmem [shape: f32[64,32], index: 14, kind: input, shape index: {}]
  %s15 = inlined_call_operand.vmem [shape: f32[16,64], index: 15, kind: input, shape index: {}]
  %s16 = inlined_call_operand.hbm [shape: f32[16,32], index: 16, kind: output, shape index: {}]
  %s17 = sld [smem:[#allocation0]]
  $region102: #{transformer_decoder_layer.1} parent=0
    _
  %s19 = ssub.s32 1, %s17
  %s20 = scalar_select 0, %s19, %s17
  $region1: #{transformer_decoder_layer.1} parent=0
    #allocation2 [shape = 'u8[8192]{0}', space=vmem, size = 0x2000, scoped, tag = 'input window, operand 0, single buffered']
    #allocation3 [shape = 's32[1]{0}', space=sflag, size = 0x4, scoped, tag = 'scoped memory for transformer_decoder_layer.1']
    #allocation4 [shape = 's32[1]{0}', space=sflag, size = 0x4, scoped, tag = 'scoped memory for transformer_decoder_layer.1']
    #allocation5 [shape = 'u8[8192]{0}', space=vmem, size = 0x2000, scoped, tag = 'input window, operand 1, single buffered']
    #allocation6 [shape = 's32[1]{0}', space=sflag, size = 0x4, scoped, tag = 'scoped memory for transformer_decoder_layer.1']
    #allocation7 [shape = 'u8[512]{0}', space=vmem, size = 0x400, scoped, tag = 'input window, operand 3, single buffered']
    #allocation8 [shape = 'u8[512]{0}', space=vmem, size = 0x400, scoped, tag = 'input window, operand 5, single buffered']
    #allocation9 [shape = 's32[1]{0}', space=sflag, size = 0x4, scoped, tag = 'scoped memory for transformer_decoder_layer.1']
    #allocation10 [shape = 'u8[512]{0}', space=vmem, size = 0x400, scoped, tag = 'input window, operand 7, single buffered']
    #allocation11 [shape = 'u8[512]{0}', space=vmem, size = 0x400, scoped, tag = 'input window, operand 9, single buffered']
    #allocation12 [shape = 's32[1]{0}', space=sflag, size = 0x4, scoped, tag = 'scoped memory for transformer_decoder_layer.1']
    #allocation13 [shape = 'u8[512]{0}', space=vmem, size = 0x400, scoped, tag = 'input window, operand 11, single buffered']
    #allocation14 [shape = 'u8[8192]{0}', space=vmem, size = 0x2000, scoped, tag = 'output window, operand 0, single buffered']
    %21 = vsyncpa [#allocation3], 0
    %22 = vsyncpa [#allocation6], 0
    %23 = vsyncpa [#allocation9], 0
    %24 = vsyncpa [#allocation12], 0
    %25 = vsyncpa [#allocation4], 0
    // Predicated region
    $region2: #{transformer_decoder_layer.1} parent=1 // pred_check
      _
    $region3: #{transformer_decoder_layer.1} parent=1 // pred_check_branch
      %27 = sbr.rel (0) target = $region5
    $region4: #{transformer_decoder_layer.1} parent=1 // pred_region
      %s29 = ssub.s32 256, 256
      %30 = vsyncadd [#allocation3], %s29
      %s31 = sshll.u32 [#allocation2], 4
      %s32 = int_to_ptr.vmem [resolvable:$true] %s31
      %37 = dma.hbm_to_vmem [thread:$0]  %s0, 256, %s32, [#allocation3], 128, 128, 8
    $region5: #{transformer_decoder_layer.1} parent=1 // pred_fallthru
      _
    // Predicated region
    $region6: #{transformer_decoder_layer.1} parent=1 // pred_check
      _
    $region7: #{transformer_decoder_layer.1} parent=1 // pred_check_branch
      %39 = sbr.rel (0) target = $region9
    $region8: #{transformer_decoder_layer.1} parent=1 // pred_region
      %s41 = ssub.s32 256, 256
      %42 = vsyncadd [#allocation6], %s41
      %s43 = sshll.u32 [#allocation5], 4
      %s44 = int_to_ptr.vmem [resolvable:$true] %s43
      %49 = dma.hbm_to_vmem [thread:$0]  %s1, 256, %s44, [#allocation6], 128, 128, 8
    $region9: #{transformer_decoder_layer.1} parent=1 // pred_fallthru
      _
    // Predicated region
    $region10: #{transformer_decoder_layer.1} parent=1 // pred_check
      _
    $region11: #{transformer_decoder_layer.1} parent=1 // pred_check_branch
      %51 = sbr.rel (0) target = $region13
    $region12: #{transformer_decoder_layer.1} parent=1 // pred_region
      _
    $region13: #{transformer_decoder_layer.1} parent=1 // pred_fallthru
      _
    // Predicated region
    $region14: #{transformer_decoder_layer.1} parent=1 // pred_check
      _
    $region15: #{transformer_decoder_layer.1} parent=1 // pred_check_branch
      %53 = sbr.rel (0) target = $region17
    $region16: #{transformer_decoder_layer.1} parent=1 // pred_region
      %s55 = ssub.s32 16, 16
      %56 = vsyncadd [#allocation6], %s55
      %s58 = sshll.u32 [#allocation7], 4
      %s59 = int_to_ptr.vmem [resolvable:$true] %s58
      %61 = dma.hbm_to_vmem [thread:$0]  %s3, 16, %s59, [#allocation6]
    $region17: #{transformer_decoder_layer.1} parent=1 // pred_fallthru
      _
    // Predicated region
    $region18: #{transformer_decoder_layer.1} parent=1 // pred_check
      _
    $region19: #{transformer_decoder_layer.1} parent=1 // pred_check_branch
      %63 = sbr.rel (0) target = $region21
    $region20: #{transformer_decoder_layer.1} parent=1 // pred_region
      _
    $region21: #{transformer_decoder_layer.1} parent=1 // pred_fallthru
      _
    // Predicated region
    $region22: #{transformer_decoder_layer.1} parent=1 // pred_check
      _
    $region23: #{transformer_decoder_layer.1} parent=1 // pred_check_branch
      %65 = sbr.rel (0) target = $region25
    $region24: #{transformer_decoder_layer.1} parent=1 // pred_region
      %s67 = ssub.s32 16, 16
      %68 = vsyncadd [#allocation9], %s67
      %s70 = sshll.u32 [#allocation8], 4
      %s71 = int_to_ptr.vmem [resolvable:$true] %s70
      %73 = dma.hbm_to_vmem [thread:$0]  %s5, 16, %s71, [#allocation9]
    $region25: #{transformer_decoder_layer.1} parent=1 // pred_fallthru
      _
    // Predicated region
    $region26: #{transformer_decoder_layer.1} parent=1 // pred_check
      _
    $region27: #{transformer_decoder_layer.1} parent=1 // pred_check_branch
      %75 = sbr.rel (0) target = $region29
    $region28: #{transformer_decoder_layer.1} parent=1 // pred_region
      _
    $region29: #{transformer_decoder_layer.1} parent=1 // pred_fallthru
      _
    // Predicated region
    $region30: #{transformer_decoder_layer.1} parent=1 // pred_check
      _
    $region31: #{transformer_decoder_layer.1} parent=1 // pred_check_branch
      %77 = sbr.rel (0) target = $region33
    $region32: #{transformer_decoder_layer.1} parent=1 // pred_region
      %s79 = ssub.s32 16, 16
      %80 = vsyncadd [#allocation9], %s79
      %s82 = sshll.u32 [#allocation10], 4
      %s83 = int_to_ptr.vmem [resolvable:$true] %s82
      %85 = dma.hbm_to_vmem [thread:$0]  %s7, 16, %s83, [#allocation9]
    $region33: #{transformer_decoder_layer.1} parent=1 // pred_fallthru
      _
    // Predicated region
    $region34: #{transformer_decoder_layer.1} parent=1 // pred_check
      _
    $region35: #{transformer_decoder_layer.1} parent=1 // pred_check_branch
      %87 = sbr.rel (0) target = $region37
    $region36: #{transformer_decoder_layer.1} parent=1 // pred_region
      _
    $region37: #{transformer_decoder_layer.1} parent=1 // pred_fallthru
      _
    // Predicated region
    $region38: #{transformer_decoder_layer.1} parent=1 // pred_check
      _
    $region39: #{transformer_decoder_layer.1} parent=1 // pred_check_branch
      %89 = sbr.rel (0) target = $region41
    $region40: #{transformer_decoder_layer.1} parent=1 // pred_region
      %s91 = ssub.s32 16, 16
      %92 = vsyncadd [#allocation12], %s91
      %s94 = sshll.u32 [#allocation11], 4
      %s95 = int_to_ptr.vmem [resolvable:$true] %s94
      %97 = dma.hbm_to_vmem [thread:$0]  %s9, 16, %s95, [#allocation12]
    $region41: #{transformer_decoder_layer.1} parent=1 // pred_fallthru
      _
    // Predicated region
    $region42: #{transformer_decoder_layer.1} parent=1 // pred_check
      _
    $region43: #{transformer_decoder_layer.1} parent=1 // pred_check_branch
      %99 = sbr.rel (0) target = $region45
    $region44: #{transformer_decoder_layer.1} parent=1 // pred_region
      _
    $region45: #{transformer_decoder_layer.1} parent=1 // pred_fallthru
      _
    // Predicated region
    $region46: #{transformer_decoder_layer.1} parent=1 // pred_check
      _
    $region47: #{transformer_decoder_layer.1} parent=1 // pred_check_branch
      %101 = sbr.rel (0) target = $region49
    $region48: #{transformer_decoder_layer.1} parent=1 // pred_region
      %s103 = ssub.s32 16, 16
      %104 = vsyncadd [#allocation12], %s103
      %s106 = sshll.u32 [#allocation13], 4
      %s107 = int_to_ptr.vmem [resolvable:$true] %s106
      %109 = dma.hbm_to_vmem [thread:$0]  %s11, 16, %s107, [#allocation12]
    $region49: #{transformer_decoder_layer.1} parent=1 // pred_fallthru
      _
    // Predicated region
    $region50: #{transformer_decoder_layer.1} parent=1 // pred_check
      _
    $region51: #{transformer_decoder_layer.1} parent=1 // pred_check_branch
      %111 = sbr.rel (0) target = $region53
    $region52: #{transformer_decoder_layer.1} parent=1 // pred_region
      _
    $region53: #{transformer_decoder_layer.1} parent=1 // pred_fallthru
      _
    // Predicated region
    $region54: #{transformer_decoder_layer.1} parent=1 // pred_check
      _
    $region55: #{transformer_decoder_layer.1} parent=1 // pred_check_branch
      %113 = sbr.rel (0) target = $region57
    $region56: #{transformer_decoder_layer.1} parent=1 // pred_region
      _
    $region57: #{transformer_decoder_layer.1} parent=1 // pred_fallthru
      _
    // Predicated region
    $region58: #{transformer_decoder_layer.1} parent=1 // pred_check
      _
    $region59: #{transformer_decoder_layer.1} parent=1 // pred_check_branch
      %115 = sbr.rel (0) target = $region61
    $region60: #{transformer_decoder_layer.1} parent=1 // pred_region
      _
    $region61: #{transformer_decoder_layer.1} parent=1 // pred_fallthru
      _
    // Predicated region
    $region62: #{transformer_decoder_layer.1} parent=1 // pred_check
      _
    $region63: #{transformer_decoder_layer.1} parent=1 // pred_check_branch
      %117 = sbr.rel (0) target = $region65
    $region64: #{transformer_decoder_layer.1} parent=1 // pred_region
      _
    $region65: #{transformer_decoder_layer.1} parent=1 // pred_fallthru
      _
    // Predicated region
    $region66: #{transformer_decoder_layer.1} parent=1 // pred_check
      _
    $region67: #{transformer_decoder_layer.1} parent=1 // pred_check_branch
      %119 = sbr.rel (0) target = $region69
    $region68: #{transformer_decoder_layer.1} parent=1 // pred_region
      %120 = dma.done [#allocation3], 256
    $region69: #{transformer_decoder_layer.1} parent=1 // pred_fallthru
      _
    // Predicated region
    $region70: #{transformer_decoder_layer.1} parent=1 // pred_check
      _
    $region71: #{transformer_decoder_layer.1} parent=1 // pred_check_branch
      %122 = sbr.rel (0) target = $region73
    $region72: #{transformer_decoder_layer.1} parent=1 // pred_region
      %123 = dma.done [#allocation6], 256
    $region73: #{transformer_decoder_layer.1} parent=1 // pred_fallthru
      _
    // Predicated region
    $region74: #{transformer_decoder_layer.1} parent=1 // pred_check
      _
    $region75: #{transformer_decoder_layer.1} parent=1 // pred_check_branch
      %125 = sbr.rel (0) target = $region77
    $region76: #{transformer_decoder_layer.1} parent=1 // pred_region
      %126 = dma.done [#allocation6], 16
    $region77: #{transformer_decoder_layer.1} parent=1 // pred_fallthru
      _
    // Predicated region
    $region78: #{transformer_decoder_layer.1} parent=1 // pred_check
      _
    $region79: #{transformer_decoder_layer.1} parent=1 // pred_check_branch
      %128 = sbr.rel (0) target = $region81
    $region80: #{transformer_decoder_layer.1} parent=1 // pred_region
      %129 = dma.done [#allocation9], 16
    $region81: #{transformer_decoder_layer.1} parent=1 // pred_fallthru
      _
    // Predicated region
    $region82: #{transformer_decoder_layer.1} parent=1 // pred_check
      _
    $region83: #{transformer_decoder_layer.1} parent=1 // pred_check_branch
      %131 = sbr.rel (0) target = $region85
    $region84: #{transformer_decoder_layer.1} parent=1 // pred_region
      %132 = dma.done [#allocation9], 16
    $region85: #{transformer_decoder_layer.1} parent=1 // pred_fallthru
      _
    // Predicated region
    $region86: #{transformer_decoder_layer.1} parent=1 // pred_check
      _
    $region87: #{transformer_decoder_layer.1} parent=1 // pred_check_branch
      %134 = sbr.rel (0) target = $region89
    $region88: #{transformer_decoder_layer.1} parent=1 // pred_region
      %135 = dma.done [#allocation12], 16
    $region89: #{transformer_decoder_layer.1} parent=1 // pred_fallthru
      _
    // Predicated region
    $region90: #{transformer_decoder_layer.1} parent=1 // pred_check
      _
    $region91: #{transformer_decoder_layer.1} parent=1 // pred_check_branch
      %137 = sbr.rel (0) target = $region93
    $region92: #{transformer_decoder_layer.1} parent=1 // pred_region
      %138 = dma.done [#allocation12], 16
    $region93: #{transformer_decoder_layer.1} parent=1 // pred_fallthru
      _
    %v139 = vld [vmem:[#allocation2] sm:$0xff]
    %v140 = vld [vmem:[#allocation2 + $0x8] sm:$0xff]
    %v141 = vld [vmem:[#allocation5] sm:$0xff]
    %v142 = vld [vmem:[#allocation5 + $0x8] sm:$0xff]
    %v143 = vld [vmem:[%s12] sm:$0xff]
    %v144 = vld [vmem:[%s12 + $0x8] sm:$0xff]
    %v145 = vld [vmem:[%s12 + $0x10] sm:$0xff]
    %v146 = vld [vmem:[%s12 + $0x18] sm:$0xff]
    %v147 = vld [vmem:[%s12 + $0x20] sm:$0xff]
    %v148 = vld [vmem:[%s12 + $0x28] sm:$0xff]
    %v149 = vld [vmem:[%s12 + $0x30] sm:$0xff]
    %v150 = vld [vmem:[%s12 + $0x38] sm:$0xff]
    %v151 = vld [vmem:[%s13] sm:$0xff]
    %v152 = vld [vmem:[%s13 + $0x8] sm:$0xff]
    %v153 = vld [vmem:[%s2] sm:$0xff]
    %v154 = vld [vmem:[%s2 + $0x8] sm:$0xff]
    %v155 = vld [vmem:[%s2 + $0x10] sm:$0xff]
    %v156 = vld [vmem:[%s2 + $0x18] sm:$0xff]
    %v157 = vld [vmem:[#allocation7] sm:$0x1]
    %v158 = vld [vmem:[%s4] sm:$0xff]
    %v159 = vld [vmem:[%s4 + $0x8] sm:$0xff]
    %v160 = vld [vmem:[%s4 + $0x10] sm:$0xff]
    %v161 = vld [vmem:[%s4 + $0x18] sm:$0xff]
    %v162 = vld [vmem:[#allocation8] sm:$0x1]
    %vm163 = vcmask 261120
    %v165 = vsel %vm163, %v139, 0
    %v168 = vsel %vm163, %v140, 0
    %170 = vmatprep.subr.mxu0 0.0
    %171 = vmatpush1.msra.mxu0 %v153
    %172 = vmatprep.subr.mxu0 0.0
    %173 = vmatpush1.msra.mxu0 %v154
    %174 = vmatprep.subr.mxu0 0.0
    %175 = vmatpush1.msra.mxu0 %v155
    %176 = vmatprep.subr.mxu0 0.0
    %177 = vmatpush1.msra.mxu0 %v156
    %178 = vmatprep.subr.mxu0 0.0
    %179 = vmatpush1.msra.mxu0 0.0
    %180 = vmatprep.subr.mxu0 0.0
    %181 = vmatpush1.msra.mxu0 0.0
    %182 = vmatprep.subr.mxu0 0.0
    %183 = vmatpush1.msra.mxu0 0.0
    %184 = vmatprep.subr.mxu0 0.0
    %185 = vmatpush1.msra.mxu0 0.0
    %186 = vmatprep.subr.mxu0 0.0
    %187 = vmatpush1.msra.mxu0 0.0
    %188 = vmatprep.subr.mxu0 0.0
    %189 = vmatpush1.msra.mxu0 0.0
    %190 = vmatprep.subr.mxu0 0.0
    %191 = vmatpush1.msra.mxu0 0.0
    %192 = vmatprep.subr.mxu0 0.0
    %193 = vmatpush1.msra.mxu0 0.0
    %194 = vmatprep.subr.mxu0 0.0
    %195 = vmatpush1.msra.mxu0 0.0
    %196 = vmatprep.subr.mxu0 0.0
    %197 = vmatpush1.msra.mxu0 0.0
    %198 = vmatprep.subr.mxu0 0.0
    %199 = vmatpush1.msra.mxu0 0.0
    %200 = vmatprep.subr.mxu0 0.0
    %201 = vmatpush1.msra.mxu0 0.0
    %202 = vmatprep.subr.mxu0 0.0
    %203 = vmatpush1.msra.mxu0 0.0
    %204 = vmatprep.subr.mxu0 0.0
    %205 = vmatpush1.msra.mxu0 0.0
    %206 = vmatprep.subr.mxu0 0.0
    %207 = vmatpush1.msra.mxu0 0.0
    %208 = vmatprep.subr.mxu0 0.0
    %209 = vmatpush1.msra.mxu0 0.0
    %210 = vmatprep.subr.mxu0 0.0
    %211 = vmatpush1.msra.mxu0 0.0
    %212 = vmatprep.subr.mxu0 0.0
    %213 = vmatpush1.msra.mxu0 0.0
    %214 = vmatprep.subr.mxu0 0.0
    %215 = vmatpush1.msra.mxu0 0.0
    %216 = vmatprep.subr.mxu0 0.0
    %217 = vmatpush1.msra.mxu0 0.0
    %218 = vmatprep.subr.mxu0 0.0
    %219 = vmatpush1.msra.mxu0 0.0
    %220 = vmatprep.subr.mxu0 0.0
    %221 = vmatpush1.msra.mxu0 0.0
    %222 = vmatprep.subr.mxu0 0.0
    %223 = vmatpush1.msra.mxu0 0.0
    %224 = vmatprep.subr.mxu0 0.0
    %225 = vmatpush1.msra.mxu0 0.0
    %226 = vmatprep.subr.mxu0 0.0
    %227 = vmatpush1.msra.mxu0 0.0
    %228 = vmatprep.subr.mxu0 0.0
    %229 = vmatpush1.msra.mxu0 0.0
    %230 = vmatprep.subr.mxu0 0.0
    %231 = vmatpush1.msra.mxu0 0.0
    %232 = vmatprep.subr.mxu0 0.0
    %233 = vmatpush1.msra.mxu0 0.0
    %234 = vmatprep.mubr.f32.mxu0 0.0
    %235 = vmatmul.mubr.f32.gmra.mrb[0].mxu0 %v165
    %v236 = vpop.f32.mrb[0].mxu0
    %v237 = vadd.f32 0.0, %v236
    %v238 = vpop.f32.mrb[0].mxu0
    %239 = vmatprep.mubr.f32.mxu0 0.0
    %240 = vmatmul.mubr.f32.gmra.mrb[0].mxu0 %v168
    %v241 = vpop.f32.mrb[0].mxu0
    %v242 = vadd.f32 0.0, %v241
    %v243 = vpop.f32.mrb[0].mxu0
    %244 = vdwg.mxu0
    %v246 = vlaneseq
    %v247 = vshrl.u32 %v246, 7
    %v248 = vsub.s32 0, %v247
    %v249 = vrot.slane %v157, %v248
    %v251 = vadd.f32 %v237, %v249
    %v252 = vadd.f32 %v242, %v249
    %261 = vrot.lane.b32.xlu0 %v143, 32
    %v262 = vpop.permute.xlu0 %261
    %263 = vrot.lane.b32.xlu0 %v144, 32
    %v264 = vpop.permute.xlu0 %263
    %265 = vrot.lane.b32.xlu0 %v145, 32
    %v266 = vpop.permute.xlu0 %265
    %267 = vrot.lane.b32.xlu0 %v146, 32
    %v268 = vpop.permute.xlu0 %267
    %269 = vrot.lane.b32.xlu0 %v147, 32
    %v270 = vpop.permute.xlu0 %269
    %271 = vrot.lane.b32.xlu0 %v148, 32
    %v272 = vpop.permute.xlu0 %271
    %273 = vrot.lane.b32.xlu0 %v149, 32
    %v274 = vpop.permute.xlu0 %273
    %275 = vrot.lane.b32.xlu0 %v150, 32
    %v276 = vpop.permute.xlu0 %275
    %v285 = vmul.f32 %v237, %v262
    %v286 = vmul.f32 %v242, %v264
    %v287 = vmul.f32 %v237, %v266
    %v288 = vmul.f32 %v242, %v268
    %v289 = vmul.f32 %v237, %v270
    %v290 = vmul.f32 %v242, %v272
    %v291 = vmul.f32 %v237, %v274
    %v292 = vmul.f32 %v242, %v276
    %293 = vrot.lane.b32.xlu0 %v143, 64
    %v294 = vpop.permute.xlu0 %293
    %295 = vrot.lane.b32.xlu0 %v144, 64
    %v296 = vpop.permute.xlu0 %295
    %297 = vrot.lane.b32.xlu0 %v145, 64
    %v298 = vpop.permute.xlu0 %297
    %299 = vrot.lane.b32.xlu0 %v146, 64
    %v300 = vpop.permute.xlu0 %299
    %301 = vrot.lane.b32.xlu0 %v147, 64
    %v302 = vpop.permute.xlu0 %301
    %303 = vrot.lane.b32.xlu0 %v148, 64
    %v304 = vpop.permute.xlu0 %303
    %305 = vrot.lane.b32.xlu0 %v149, 64
    %v306 = vpop.permute.xlu0 %305
    %307 = vrot.lane.b32.xlu0 %v150, 64
    %v308 = vpop.permute.xlu0 %307
    %v317 = vmul.f32 %v237, %v294
    %v318 = vmul.f32 %v242, %v296
    %v319 = vmul.f32 %v237, %v298
    %v320 = vmul.f32 %v242, %v300
    %v321 = vmul.f32 %v237, %v302
    %v322 = vmul.f32 %v242, %v304
    %v323 = vmul.f32 %v237, %v306
    %v324 = vmul.f32 %v242, %v308
    %333 = vrot.lane.b32.xlu0 %v285, 96
    %v334 = vpop.permute.xlu0 %333
    %335 = vrot.lane.b32.xlu0 %v286, 96
    %v336 = vpop.permute.xlu0 %335
    %337 = vrot.lane.b32.xlu0 %v287, 96
    %v338 = vpop.permute.xlu0 %337
    %339 = vrot.lane.b32.xlu0 %v288, 96
    %v340 = vpop.permute.xlu0 %339
    %341 = vrot.lane.b32.xlu0 %v289, 96
    %v342 = vpop.permute.xlu0 %341
    %343 = vrot.lane.b32.xlu0 %v290, 96
    %v344 = vpop.permute.xlu0 %343
    %345 = vrot.lane.b32.xlu0 %v291, 96
    %v346 = vpop.permute.xlu0 %345
    %347 = vrot.lane.b32.xlu0 %v292, 96
    %v348 = vpop.permute.xlu0 %347
    %v350 = vsel %vm163, %v251, 0
    %v353 = vsel %vm163, %v252, 0
    %v355 = vsel %vm163, %v334, 0
    %v357 = vsel %vm163, %v336, 0
    %v359 = vsel %vm163, %v338, 0
    %v361 = vsel %vm163, %v340, 0
    %v363 = vsel %vm163, %v342, 0
    %v365 = vsel %vm163, %v344, 0
    %v367 = vsel %vm163, %v346, 0
    %v369 = vsel %vm163, %v348, 0
    %371 = vmatprep.subr.mxu0 0.0
    %372 = vmatpush1.xpose.msra.mxu0 %v355
    %373 = vmatprep.subr.mxu0 0.0
    %374 = vmatpush1.xpose.msra.mxu0 %v357
    %375 = vmatprep.subr.mxu0 0.0
    %376 = vmatpush1.xpose.msra.mxu0 %v359
    %377 = vmatprep.subr.mxu0 0.0
    %378 = vmatpush1.xpose.msra.mxu0 %v361
    %379 = vmatprep.subr.mxu0 0.0
    %380 = vmatpush1.xpose.msra.mxu0 %v363
    %381 = vmatprep.subr.mxu0 0.0
    %382 = vmatpush1.xpose.msra.mxu0 %v365
    %383 = vmatprep.subr.mxu0 0.0
    %384 = vmatpush1.xpose.msra.mxu0 %v367
    %385 = vmatprep.subr.mxu0 0.0
    %386 = vmatpush1.xpose.msra.mxu0 %v369
    %387 = vmatprep.subr.mxu0 0.0
    %388 = vmatpush1.xpose.msra.mxu0 0.0
    %389 = vmatprep.subr.mxu0 0.0
    %390 = vmatpush1.xpose.msra.mxu0 0.0
    %391 = vmatprep.subr.mxu0 0.0
    %392 = vmatpush1.xpose.msra.mxu0 0.0
    %393 = vmatprep.subr.mxu0 0.0
    %394 = vmatpush1.xpose.msra.mxu0 0.0
    %395 = vmatprep.subr.mxu0 0.0
    %396 = vmatpush1.xpose.msra.mxu0 0.0
    %397 = vmatprep.subr.mxu0 0.0
    %398 = vmatpush1.xpose.msra.mxu0 0.0
    %399 = vmatprep.subr.mxu0 0.0
    %400 = vmatpush1.xpose.msra.mxu0 0.0
    %401 = vmatprep.subr.mxu0 0.0
    %402 = vmatpush1.xpose.msra.mxu0 0.0
    %403 = vmatprep.subr.mxu0 0.0
    %404 = vmatpush1.xpose.msra.mxu0 0.0
    %405 = vmatprep.subr.mxu0 0.0
    %406 = vmatpush1.xpose.msra.mxu0 0.0
    %407 = vmatprep.subr.mxu0 0.0
    %408 = vmatpush1.xpose.msra.mxu0 0.0
    %409 = vmatprep.subr.mxu0 0.0
    %410 = vmatpush1.xpose.msra.mxu0 0.0
    %411 = vmatprep.subr.mxu0 0.0
    %412 = vmatpush1.xpose.msra.mxu0 0.0
    %413 = vmatprep.subr.mxu0 0.0
    %414 = vmatpush1.xpose.msra.mxu0 0.0
    %415 = vmatprep.subr.mxu0 0.0
    %416 = vmatpush1.xpose.msra.mxu0 0.0
    %417 = vmatprep.subr.mxu0 0.0
    %418 = vmatpush1.xpose.msra.mxu0 0.0
    %419 = vmatprep.subr.mxu0 0.0
    %420 = vmatpush1.xpose.msra.mxu0 0.0
    %421 = vmatprep.subr.mxu0 0.0
    %422 = vmatpush1.xpose.msra.mxu0 0.0
    %423 = vmatprep.subr.mxu0 0.0
    %424 = vmatpush1.xpose.msra.mxu0 0.0
    %425 = vmatprep.subr.mxu0 0.0
    %426 = vmatpush1.xpose.msra.mxu0 0.0
    %427 = vmatprep.subr.mxu0 0.0
    %428 = vmatpush1.xpose.msra.mxu0 0.0
    %429 = vmatprep.subr.mxu0 0.0
    %430 = vmatpush1.xpose.msra.mxu0 0.0
    %431 = vmatprep.subr.mxu0 0.0
    %432 = vmatpush1.xpose.msra.mxu0 0.0
    %433 = vmatprep.subr.mxu0 0.0
    %434 = vmatpush1.xpose.msra.mxu0 0.0
    %435 = vmatprep.mubr.f32.mxu0 0.0
    %436 = vmatmul.mubr.f32.gmra.mrb[0].mxu0 %v350
    %v437 = vpop.f32.mrb[0].mxu0
    %v438 = vadd.f32 %v151, %v437
    %v439 = vpop.f32.mrb[0].mxu0
    %440 = vmatprep.mubr.f32.mxu0 0.0
    %441 = vmatmul.mubr.f32.gmra.mrb[0].mxu0 %v353
    %v442 = vpop.f32.mrb[0].mxu0
    %v443 = vadd.f32 %v152, %v442
    %v444 = vpop.f32.mrb[0].mxu0
    %445 = vdwg.mxu0
    %vm446 = vcmask 523264
    %v447 = vsel %vm446, %v438, -inf
    %448 = vmax.xlane.f32.xlu0 %v447
    %v449 = vpop.xlane.xlu0 %448
    %v450 = vsel %vm446, %v443, -inf
    %451 = vmax.xlane.f32.xlu0 %v450
    %v452 = vpop.xlane.xlu0 %451
    %v453 = vsub.f32 %v438, %v449
    %v454 = vsub.f32 %v443, %v452
    %v455 = vmul.f32 %v453, 1.442695
    %v456 = vpow.pop %v455
    %v457 = vmul.f32 %v454, 1.442695
    %v458 = vpow.pop %v457
    %v460 = vsel %vm446, %v456, 0
    %v463 = vsel %vm446, %v458, 0
    %465 = vmatprep.subr.mxu0 0.0
    %466 = vmatpush1.msra.mxu0 %v143
    %467 = vmatprep.subr.mxu0 0.0
    %468 = vmatpush1.msra.mxu0 %v144
    %469 = vmatprep.subr.mxu0 0.0
    %470 = vmatpush1.msra.mxu0 %v145
    %471 = vmatprep.subr.mxu0 0.0
    %472 = vmatpush1.msra.mxu0 %v146
    %473 = vmatprep.subr.mxu0 0.0
    %474 = vmatpush1.msra.mxu0 %v147
    %475 = vmatprep.subr.mxu0 0.0
    %476 = vmatpush1.msra.mxu0 %v148
    %477 = vmatprep.subr.mxu0 0.0
    %478 = vmatpush1.msra.mxu0 %v149
    %479 = vmatprep.subr.mxu0 0.0
    %480 = vmatpush1.msra.mxu0 %v150
    %481 = vmatprep.subr.mxu0 0.0
    %482 = vmatpush1.msra.mxu0 0.0
    %483 = vmatprep.subr.mxu0 0.0
    %484 = vmatpush1.msra.mxu0 0.0
    %485 = vmatprep.subr.mxu0 0.0
    %486 = vmatpush1.msra.mxu0 0.0
    %487 = vmatprep.subr.mxu0 0.0
    %488 = vmatpush1.msra.mxu0 0.0
    %489 = vmatprep.subr.mxu0 0.0
    %490 = vmatpush1.msra.mxu0 0.0
    %491 = vmatprep.subr.mxu0 0.0
    %492 = vmatpush1.msra.mxu0 0.0
    %493 = vmatprep.subr.mxu0 0.0
    %494 = vmatpush1.msra.mxu0 0.0
    %495 = vmatprep.subr.mxu0 0.0
    %496 = vmatpush1.msra.mxu0 0.0
    %497 = vmatprep.subr.mxu0 0.0
    %498 = vmatpush1.msra.mxu0 0.0
    %499 = vmatprep.subr.mxu0 0.0
    %500 = vmatpush1.msra.mxu0 0.0
    %501 = vmatprep.subr.mxu0 0.0
    %502 = vmatpush1.msra.mxu0 0.0
    %503 = vmatprep.subr.mxu0 0.0
    %504 = vmatpush1.msra.mxu0 0.0
    %505 = vmatprep.subr.mxu0 0.0
    %506 = vmatpush1.msra.mxu0 0.0
    %507 = vmatprep.subr.mxu0 0.0
    %508 = vmatpush1.msra.mxu0 0.0
    %509 = vmatprep.subr.mxu0 0.0
    %510 = vmatpush1.msra.mxu0 0.0
    %511 = vmatprep.subr.mxu0 0.0
    %512 = vmatpush1.msra.mxu0 0.0
    %513 = vmatprep.subr.mxu0 0.0
    %514 = vmatpush1.msra.mxu0 0.0
    %515 = vmatprep.subr.mxu0 0.0
    %516 = vmatpush1.msra.mxu0 0.0
    %517 = vmatprep.subr.mxu0 0.0
    %518 = vmatpush1.msra.mxu0 0.0
    %519 = vmatprep.subr.mxu0 0.0
    %520 = vmatpush1.msra.mxu0 0.0
    %521 = vmatprep.subr.mxu0 0.0
    %522 = vmatpush1.msra.mxu0 0.0
    %523 = vmatprep.subr.mxu0 0.0
    %524 = vmatpush1.msra.mxu0 0.0
    %525 = vmatprep.subr.mxu0 0.0
    %526 = vmatpush1.msra.mxu0 0.0
    %527 = vmatprep.subr.mxu0 0.0
    %528 = vmatpush1.msra.mxu0 0.0
    %529 = vmatprep.mubr.f32.mxu0 0.0
    %530 = vmatmul.mubr.f32.gmra.mrb[0].mxu0 %v460
    %v531 = vpop.f32.mrb[0].mxu0
    %v532 = vadd.f32 0.0, %v531
    %v533 = vpop.f32.mrb[0].mxu0
    %534 = vmatprep.mubr.f32.mxu0 0.0
    %535 = vmatmul.mubr.f32.gmra.mrb[0].mxu0 %v463
    %v536 = vpop.f32.mrb[0].mxu0
    %v537 = vadd.f32 0.0, %v536
    %v538 = vpop.f32.mrb[0].mxu0
    %539 = vdwg.mxu0
    %548 = vrot.lane.b32.xlu0 %v317, 64
    %v549 = vpop.permute.xlu0 %548
    %550 = vrot.lane.b32.xlu0 %v318, 64
    %v551 = vpop.permute.xlu0 %550
    %552 = vrot.lane.b32.xlu0 %v319, 64
    %v553 = vpop.permute.xlu0 %552
    %554 = vrot.lane.b32.xlu0 %v320, 64
    %v555 = vpop.permute.xlu0 %554
    %556 = vrot.lane.b32.xlu0 %v321, 64
    %v557 = vpop.permute.xlu0 %556
    %558 = vrot.lane.b32.xlu0 %v322, 64
    %v559 = vpop.permute.xlu0 %558
    %560 = vrot.lane.b32.xlu0 %v323, 64
    %v561 = vpop.permute.xlu0 %560
    %562 = vrot.lane.b32.xlu0 %v324, 64
    %v563 = vpop.permute.xlu0 %562
    %572 = vmatprep.subr.mxu0 0.0
    %573 = vmatpush1.msra.mxu0 %v549
    %574 = vmatprep.subr.mxu0 0.0
    %575 = vmatpush1.msra.mxu0 %v551
    %576 = vmatprep.subr.mxu0 0.0
    %577 = vmatpush1.msra.mxu0 %v553
    %578 = vmatprep.subr.mxu0 0.0
    %579 = vmatpush1.msra.mxu0 %v555
    %580 = vmatprep.subr.mxu0 0.0
    %581 = vmatpush1.msra.mxu0 %v557
    %582 = vmatprep.subr.mxu0 0.0
    %583 = vmatpush1.msra.mxu0 %v559
    %584 = vmatprep.subr.mxu0 0.0
    %585 = vmatpush1.msra.mxu0 %v561
    %586 = vmatprep.subr.mxu0 0.0
    %587 = vmatpush1.msra.mxu0 %v563
    %588 = vmatprep.subr.mxu0 0.0
    %589 = vmatpush1.msra.mxu0 0.0
    %590 = vmatprep.subr.mxu0 0.0
    %591 = vmatpush1.msra.mxu0 0.0
    %592 = vmatprep.subr.mxu0 0.0
    %593 = vmatpush1.msra.mxu0 0.0
    %594 = vmatprep.subr.mxu0 0.0
    %595 = vmatpush1.msra.mxu0 0.0
    %596 = vmatprep.subr.mxu0 0.0
    %597 = vmatpush1.msra.mxu0 0.0
    %598 = vmatprep.subr.mxu0 0.0
    %599 = vmatpush1.msra.mxu0 0.0
    %600 = vmatprep.subr.mxu0 0.0
    %601 = vmatpush1.msra.mxu0 0.0
    %602 = vmatprep.subr.mxu0 0.0
    %603 = vmatpush1.msra.mxu0 0.0
    %604 = vmatprep.subr.mxu0 0.0
    %605 = vmatpush1.msra.mxu0 0.0
    %606 = vmatprep.subr.mxu0 0.0
    %607 = vmatpush1.msra.mxu0 0.0
    %608 = vmatprep.subr.mxu0 0.0
    %609 = vmatpush1.msra.mxu0 0.0
    %610 = vmatprep.subr.mxu0 0.0
    %611 = vmatpush1.msra.mxu0 0.0
    %612 = vmatprep.subr.mxu0 0.0
    %613 = vmatpush1.msra.mxu0 0.0
    %614 = vmatprep.subr.mxu0 0.0
    %615 = vmatpush1.msra.mxu0 0.0
    %616 = vmatprep.subr.mxu0 0.0
    %617 = vmatpush1.msra.mxu0 0.0
    %618 = vmatprep.subr.mxu0 0.0
    %619 = vmatpush1.msra.mxu0 0.0
    %620 = vmatprep.subr.mxu0 0.0
    %621 = vmatpush1.msra.mxu0 0.0
    %622 = vmatprep.subr.mxu0 0.0
    %623 = vmatpush1.msra.mxu0 0.0
    %624 = vmatprep.subr.mxu0 0.0
    %625 = vmatpush1.msra.mxu0 0.0
    %626 = vmatprep.subr.mxu0 0.0
    %627 = vmatpush1.msra.mxu0 0.0
    %628 = vmatprep.subr.mxu0 0.0
    %629 = vmatpush1.msra.mxu0 0.0
    %630 = vmatprep.subr.mxu0 0.0
    %631 = vmatpush1.msra.mxu0 0.0
    %632 = vmatprep.subr.mxu0 0.0
    %633 = vmatpush1.msra.mxu0 0.0
    %634 = vmatprep.subr.mxu0 0.0
    %635 = vmatpush1.msra.mxu0 0.0
    %636 = vmatprep.mubr.f32.mxu0 0.0
    %637 = vmatmul.mubr.f32.gmra.mrb[0].mxu0 %v460
    %v638 = vpop.f32.mrb[0].mxu0
    %v639 = vadd.f32 0.0, %v638
    %v640 = vpop.f32.mrb[0].mxu0
    %641 = vmatprep.mubr.f32.mxu0 0.0
    %642 = vmatmul.mubr.f32.gmra.mrb[0].mxu0 %v463
    %v643 = vpop.f32.mrb[0].mxu0
    %v644 = vadd.f32 0.0, %v643
    %v645 = vpop.f32.mrb[0].mxu0
    %646 = vdwg.mxu0
    %v647 = vrcp.pop %v532
    %v648 = vrcp.pop %v537
    %v649 = vmul.f32 %v532, %v647
    %v650 = vmul.f32 %v537, %v648
    %v651 = vsub.f32 2.0, %v649
    %v652 = vsub.f32 2.0, %v650
    %v653 = vmul.f32 %v647, %v651
    %v654 = vmul.f32 %v648, %v652
    %v655 = vmul.f32 %v639, %v653
    %v656 = vmul.f32 %v644, %v654
    %v658 = vlaneseq
    %v659 = vshrl.u32 %v658, 7
    %v660 = vsub.s32 0, %v659
    %v661 = vrot.slane %v162, %v660
    %v664 = vsel %vm163, %v655, 0
    %v667 = vsel %vm163, %v656, 0
    %669 = vmatprep.subr.mxu0 0.0
    %670 = vmatpush1.msra.mxu0 %v158
    %671 = vmatprep.subr.mxu0 0.0
    %672 = vmatpush1.msra.mxu0 %v159
    %673 = vmatprep.subr.mxu0 0.0
    %674 = vmatpush1.msra.mxu0 %v160
    %675 = vmatprep.subr.mxu0 0.0
    %676 = vmatpush1.msra.mxu0 %v161
    %677 = vmatprep.subr.mxu0 0.0
    %678 = vmatpush1.msra.mxu0 0.0
    %679 = vmatprep.subr.mxu0 0.0
    %680 = vmatpush1.msra.mxu0 0.0
    %681 = vmatprep.subr.mxu0 0.0
    %682 = vmatpush1.msra.mxu0 0.0
    %683 = vmatprep.subr.mxu0 0.0
    %684 = vmatpush1.msra.mxu0 0.0
    %685 = vmatprep.subr.mxu0 0.0
    %686 = vmatpush1.msra.mxu0 0.0
    %687 = vmatprep.subr.mxu0 0.0
    %688 = vmatpush1.msra.mxu0 0.0
    %689 = vmatprep.subr.mxu0 0.0
    %690 = vmatpush1.msra.mxu0 0.0
    %691 = vmatprep.subr.mxu0 0.0
    %692 = vmatpush1.msra.mxu0 0.0
    %693 = vmatprep.subr.mxu0 0.0
    %694 = vmatpush1.msra.mxu0 0.0
    %695 = vmatprep.subr.mxu0 0.0
    %696 = vmatpush1.msra.mxu0 0.0
    %697 = vmatprep.subr.mxu0 0.0
    %698 = vmatpush1.msra.mxu0 0.0
    %699 = vmatprep.subr.mxu0 0.0
    %700 = vmatpush1.msra.mxu0 0.0
    %701 = vmatprep.subr.mxu0 0.0
    %702 = vmatpush1.msra.mxu0 0.0
    %703 = vmatprep.subr.mxu0 0.0
    %704 = vmatpush1.msra.mxu0 0.0
    %705 = vmatprep.subr.mxu0 0.0
    %706 = vmatpush1.msra.mxu0 0.0
    %707 = vmatprep.subr.mxu0 0.0
    %708 = vmatpush1.msra.mxu0 0.0
    %709 = vmatprep.subr.mxu0 0.0
    %710 = vmatpush1.msra.mxu0 0.0
    %711 = vmatprep.subr.mxu0 0.0
    %712 = vmatpush1.msra.mxu0 0.0
    %713 = vmatprep.subr.mxu0 0.0
    %714 = vmatpush1.msra.mxu0 0.0
    %715 = vmatprep.subr.mxu0 0.0
    %716 = vmatpush1.msra.mxu0 0.0
    %717 = vmatprep.subr.mxu0 0.0
    %718 = vmatpush1.msra.mxu0 0.0
    %719 = vmatprep.subr.mxu0 0.0
    %720 = vmatpush1.msra.mxu0 0.0
    %721 = vmatprep.subr.mxu0 0.0
    %722 = vmatpush1.msra.mxu0 0.0
    %723 = vmatprep.subr.mxu0 0.0
    %724 = vmatpush1.msra.mxu0 0.0
    %725 = vmatprep.subr.mxu0 0.0
    %726 = vmatpush1.msra.mxu0 0.0
    %727 = vmatprep.subr.mxu0 0.0
    %728 = vmatpush1.msra.mxu0 0.0
    %729 = vmatprep.subr.mxu0 0.0
    %730 = vmatpush1.msra.mxu0 0.0
    %731 = vmatprep.subr.mxu0 0.0
    %732 = vmatpush1.msra.mxu0 0.0
    %733 = vmatprep.mubr.f32.mxu0 0.0
    %734 = vmatmul.mubr.f32.gmra.mrb[0].mxu0 %v664
    %v735 = vpop.f32.mrb[0].mxu0
    %v736 = vadd.f32 %v661, %v735
    %v737 = vpop.f32.mrb[0].mxu0
    %738 = vmatprep.mubr.f32.mxu0 0.0
    %739 = vmatmul.mubr.f32.gmra.mrb[0].mxu0 %v667
    %v740 = vpop.f32.mrb[0].mxu0
    %v741 = vadd.f32 %v661, %v740
    %v742 = vpop.f32.mrb[0].mxu0
    %743 = vdwg.mxu0
    %v744 = vadd.f32 %v139, %v736
    %v745 = vadd.f32 %v140, %v741
    %v746 = vld [vmem:[%s14] sm:$0xff]
    %v747 = vld [vmem:[%s14 + $0x8] sm:$0xff]
    %v748 = vld [vmem:[%s14 + $0x10] sm:$0xff]
    %v749 = vld [vmem:[%s14 + $0x18] sm:$0xff]
    %v750 = vld [vmem:[%s14 + $0x20] sm:$0xff]
    %v751 = vld [vmem:[%s14 + $0x28] sm:$0xff]
    %v752 = vld [vmem:[%s14 + $0x30] sm:$0xff]
    %v753 = vld [vmem:[%s14 + $0x38] sm:$0xff]
    %v754 = vld [vmem:[%s15] sm:$0xff]
    %v755 = vld [vmem:[%s15 + $0x8] sm:$0xff]
    %v756 = vld [vmem:[%s6] sm:$0xff]
    %v757 = vld [vmem:[%s6 + $0x8] sm:$0xff]
    %v758 = vld [vmem:[%s6 + $0x10] sm:$0xff]
    %v759 = vld [vmem:[%s6 + $0x18] sm:$0xff]
    %v760 = vld [vmem:[#allocation10] sm:$0x1]
    %v761 = vld [vmem:[%s8] sm:$0xff]
    %v762 = vld [vmem:[%s8 + $0x8] sm:$0xff]
    %v763 = vld [vmem:[%s8 + $0x10] sm:$0xff]
    %v764 = vld [vmem:[%s8 + $0x18] sm:$0xff]
    %v765 = vld [vmem:[#allocation11] sm:$0x1]
    %v767 = vsel %vm163, %v744, 0
    %v770 = vsel %vm163, %v745, 0
    %772 = vmatprep.subr.mxu0 0.0
    %773 = vmatpush1.msra.mxu0 %v756
    %774 = vmatprep.subr.mxu0 0.0
    %775 = vmatpush1.msra.mxu0 %v757
    %776 = vmatprep.subr.mxu0 0.0
    %777 = vmatpush1.msra.mxu0 %v758
    %778 = vmatprep.subr.mxu0 0.0
    %779 = vmatpush1.msra.mxu0 %v759
    %780 = vmatprep.subr.mxu0 0.0
    %781 = vmatpush1.msra.mxu0 0.0
    %782 = vmatprep.subr.mxu0 0.0
    %783 = vmatpush1.msra.mxu0 0.0
    %784 = vmatprep.subr.mxu0 0.0
    %785 = vmatpush1.msra.mxu0 0.0
    %786 = vmatprep.subr.mxu0 0.0
    %787 = vmatpush1.msra.mxu0 0.0
    %788 = vmatprep.subr.mxu0 0.0
    %789 = vmatpush1.msra.mxu0 0.0
    %790 = vmatprep.subr.mxu0 0.0
    %791 = vmatpush1.msra.mxu0 0.0
    %792 = vmatprep.subr.mxu0 0.0
    %793 = vmatpush1.msra.mxu0 0.0
    %794 = vmatprep.subr.mxu0 0.0
    %795 = vmatpush1.msra.mxu0 0.0
    %796 = vmatprep.subr.mxu0 0.0
    %797 = vmatpush1.msra.mxu0 0.0
    %798 = vmatprep.subr.mxu0 0.0
    %799 = vmatpush1.msra.mxu0 0.0
    %800 = vmatprep.subr.mxu0 0.0
    %801 = vmatpush1.msra.mxu0 0.0
    %802 = vmatprep.subr.mxu0 0.0
    %803 = vmatpush1.msra.mxu0 0.0
    %804 = vmatprep.subr.mxu0 0.0
    %805 = vmatpush1.msra.mxu0 0.0
    %806 = vmatprep.subr.mxu0 0.0
    %807 = vmatpush1.msra.mxu0 0.0
    %808 = vmatprep.subr.mxu0 0.0
    %809 = vmatpush1.msra.mxu0 0.0
    %810 = vmatprep.subr.mxu0 0.0
    %811 = vmatpush1.msra.mxu0 0.0
    %812 = vmatprep.subr.mxu0 0.0
    %813 = vmatpush1.msra.mxu0 0.0
    %814 = vmatprep.subr.mxu0 0.0
    %815 = vmatpush1.msra.mxu0 0.0
    %816 = vmatprep.subr.mxu0 0.0
    %817 = vmatpush1.msra.mxu0 0.0
    %818 = vmatprep.subr.mxu0 0.0
    %819 = vmatpush1.msra.mxu0 0.0
    %820 = vmatprep.subr.mxu0 0.0
    %821 = vmatpush1.msra.mxu0 0.0
    %822 = vmatprep.subr.mxu0 0.0
    %823 = vmatpush1.msra.mxu0 0.0
    %824 = vmatprep.subr.mxu0 0.0
    %825 = vmatpush1.msra.mxu0 0.0
    %826 = vmatprep.subr.mxu0 0.0
    %827 = vmatpush1.msra.mxu0 0.0
    %828 = vmatprep.subr.mxu0 0.0
    %829 = vmatpush1.msra.mxu0 0.0
    %830 = vmatprep.subr.mxu0 0.0
    %831 = vmatpush1.msra.mxu0 0.0
    %832 = vmatprep.subr.mxu0 0.0
    %833 = vmatpush1.msra.mxu0 0.0
    %834 = vmatprep.subr.mxu0 0.0
    %835 = vmatpush1.msra.mxu0 0.0
    %836 = vmatprep.mubr.f32.mxu0 0.0
    %837 = vmatmul.mubr.f32.gmra.mrb[0].mxu0 %v767
    %v838 = vpop.f32.mrb[0].mxu0
    %v839 = vadd.f32 0.0, %v838
    %v840 = vpop.f32.mrb[0].mxu0
    %841 = vmatprep.mubr.f32.mxu0 0.0
    %842 = vmatmul.mubr.f32.gmra.mrb[0].mxu0 %v770
    %v843 = vpop.f32.mrb[0].mxu0
    %v844 = vadd.f32 0.0, %v843
    %v845 = vpop.f32.mrb[0].mxu0
    %846 = vdwg.mxu0
    %v848 = vsel %vm163, %v141, 0
    %v851 = vsel %vm163, %v142, 0
    %853 = vmatprep.subr.mxu0 0.0
    %854 = vmatpush1.msra.mxu0 %v756
    %855 = vmatprep.subr.mxu0 0.0
    %856 = vmatpush1.msra.mxu0 %v757
    %857 = vmatprep.subr.mxu0 0.0
    %858 = vmatpush1.msra.mxu0 %v758
    %859 = vmatprep.subr.mxu0 0.0
    %860 = vmatpush1.msra.mxu0 %v759
    %861 = vmatprep.subr.mxu0 0.0
    %862 = vmatpush1.msra.mxu0 0.0
    %863 = vmatprep.subr.mxu0 0.0
    %864 = vmatpush1.msra.mxu0 0.0
    %865 = vmatprep.subr.mxu0 0.0
    %866 = vmatpush1.msra.mxu0 0.0
    %867 = vmatprep.subr.mxu0 0.0
    %868 = vmatpush1.msra.mxu0 0.0
    %869 = vmatprep.subr.mxu0 0.0
    %870 = vmatpush1.msra.mxu0 0.0
    %871 = vmatprep.subr.mxu0 0.0
    %872 = vmatpush1.msra.mxu0 0.0
    %873 = vmatprep.subr.mxu0 0.0
    %874 = vmatpush1.msra.mxu0 0.0
    %875 = vmatprep.subr.mxu0 0.0
    %876 = vmatpush1.msra.mxu0 0.0
    %877 = vmatprep.subr.mxu0 0.0
    %878 = vmatpush1.msra.mxu0 0.0
    %879 = vmatprep.subr.mxu0 0.0
    %880 = vmatpush1.msra.mxu0 0.0
    %881 = vmatprep.subr.mxu0 0.0
    %882 = vmatpush1.msra.mxu0 0.0
    %883 = vmatprep.subr.mxu0 0.0
    %884 = vmatpush1.msra.mxu0 0.0
    %885 = vmatprep.subr.mxu0 0.0
    %886 = vmatpush1.msra.mxu0 0.0
    %887 = vmatprep.subr.mxu0 0.0
    %888 = vmatpush1.msra.mxu0 0.0
    %889 = vmatprep.subr.mxu0 0.0
    %890 = vmatpush1.msra.mxu0 0.0
    %891 = vmatprep.subr.mxu0 0.0
    %892 = vmatpush1.msra.mxu0 0.0
    %893 = vmatprep.subr.mxu0 0.0
    %894 = vmatpush1.msra.mxu0 0.0
    %895 = vmatprep.subr.mxu0 0.0
    %896 = vmatpush1.msra.mxu0 0.0
    %897 = vmatprep.subr.mxu0 0.0
    %898 = vmatpush1.msra.mxu0 0.0
    %899 = vmatprep.subr.mxu0 0.0
    %900 = vmatpush1.msra.mxu0 0.0
    %901 = vmatprep.subr.mxu0 0.0
    %902 = vmatpush1.msra.mxu0 0.0
    %903 = vmatprep.subr.mxu0 0.0
    %904 = vmatpush1.msra.mxu0 0.0
    %905 = vmatprep.subr.mxu0 0.0
    %906 = vmatpush1.msra.mxu0 0.0
    %907 = vmatprep.subr.mxu0 0.0
    %908 = vmatpush1.msra.mxu0 0.0
    %909 = vmatprep.subr.mxu0 0.0
    %910 = vmatpush1.msra.mxu0 0.0
    %911 = vmatprep.subr.mxu0 0.0
    %912 = vmatpush1.msra.mxu0 0.0
    %913 = vmatprep.subr.mxu0 0.0
    %914 = vmatpush1.msra.mxu0 0.0
    %915 = vmatprep.subr.mxu0 0.0
    %916 = vmatpush1.msra.mxu0 0.0
    %917 = vmatprep.mubr.f32.mxu0 0.0
    %918 = vmatmul.mubr.f32.gmra.mrb[0].mxu0 %v848
    %v919 = vpop.f32.mrb[0].mxu0
    %v920 = vadd.f32 0.0, %v919
    %v921 = vpop.f32.mrb[0].mxu0
    %922 = vmatprep.mubr.f32.mxu0 0.0
    %923 = vmatmul.mubr.f32.gmra.mrb[0].mxu0 %v851
    %v924 = vpop.f32.mrb[0].mxu0
    %v925 = vadd.f32 0.0, %v924
    %v926 = vpop.f32.mrb[0].mxu0
    %927 = vdwg.mxu0
    %v929 = vlaneseq
    %v930 = vshrl.u32 %v929, 7
    %v931 = vsub.s32 0, %v930
    %v932 = vrot.slane %v760, %v931
    %v934 = vadd.f32 %v839, %v932
    %v935 = vadd.f32 %v844, %v932
    %944 = vrot.lane.b32.xlu0 %v746, 32
    %v945 = vpop.permute.xlu0 %944
    %946 = vrot.lane.b32.xlu0 %v747, 32
    %v947 = vpop.permute.xlu0 %946
    %948 = vrot.lane.b32.xlu0 %v748, 32
    %v949 = vpop.permute.xlu0 %948
    %950 = vrot.lane.b32.xlu0 %v749, 32
    %v951 = vpop.permute.xlu0 %950
    %952 = vrot.lane.b32.xlu0 %v750, 32
    %v953 = vpop.permute.xlu0 %952
    %954 = vrot.lane.b32.xlu0 %v751, 32
    %v955 = vpop.permute.xlu0 %954
    %956 = vrot.lane.b32.xlu0 %v752, 32
    %v957 = vpop.permute.xlu0 %956
    %958 = vrot.lane.b32.xlu0 %v753, 32
    %v959 = vpop.permute.xlu0 %958
    %v968 = vmul.f32 %v920, %v945
    %v969 = vmul.f32 %v925, %v947
    %v970 = vmul.f32 %v920, %v949
    %v971 = vmul.f32 %v925, %v951
    %v972 = vmul.f32 %v920, %v953
    %v973 = vmul.f32 %v925, %v955
    %v974 = vmul.f32 %v920, %v957
    %v975 = vmul.f32 %v925, %v959
    %976 = vrot.lane.b32.xlu0 %v746, 64
    %v977 = vpop.permute.xlu0 %976
    %978 = vrot.lane.b32.xlu0 %v747, 64
    %v979 = vpop.permute.xlu0 %978
    %980 = vrot.lane.b32.xlu0 %v748, 64
    %v981 = vpop.permute.xlu0 %980
    %982 = vrot.lane.b32.xlu0 %v749, 64
    %v983 = vpop.permute.xlu0 %982
    %984 = vrot.lane.b32.xlu0 %v750, 64
    %v985 = vpop.permute.xlu0 %984
    %986 = vrot.lane.b32.xlu0 %v751, 64
    %v987 = vpop.permute.xlu0 %986
    %988 = vrot.lane.b32.xlu0 %v752, 64
    %v989 = vpop.permute.xlu0 %988
    %990 = vrot.lane.b32.xlu0 %v753, 64
    %v991 = vpop.permute.xlu0 %990
    %v1000 = vmul.f32 %v920, %v977
    %v1001 = vmul.f32 %v925, %v979
    %v1002 = vmul.f32 %v920, %v981
    %v1003 = vmul.f32 %v925, %v983
    %v1004 = vmul.f32 %v920, %v985
    %v1005 = vmul.f32 %v925, %v987
    %v1006 = vmul.f32 %v920, %v989
    %v1007 = vmul.f32 %v925, %v991
    %1016 = vrot.lane.b32.xlu0 %v968, 96
    %v1017 = vpop.permute.xlu0 %1016
    %1018 = vrot.lane.b32.xlu0 %v969, 96
    %v1019 = vpop.permute.xlu0 %1018
    %1020 = vrot.lane.b32.xlu0 %v970, 96
    %v1021 = vpop.permute.xlu0 %1020
    %1022 = vrot.lane.b32.xlu0 %v971, 96
    %v1023 = vpop.permute.xlu0 %1022
    %1024 = vrot.lane.b32.xlu0 %v972, 96
    %v1025 = vpop.permute.xlu0 %1024
    %1026 = vrot.lane.b32.xlu0 %v973, 96
    %v1027 = vpop.permute.xlu0 %1026
    %1028 = vrot.lane.b32.xlu0 %v974, 96
    %v1029 = vpop.permute.xlu0 %1028
    %1030 = vrot.lane.b32.xlu0 %v975, 96
    %v1031 = vpop.permute.xlu0 %1030
    %v1033 = vsel %vm163, %v934, 0
    %v1036 = vsel %vm163, %v935, 0
    %v1038 = vsel %vm163, %v1017, 0
    %v1040 = vsel %vm163, %v1019, 0
    %v1042 = vsel %vm163, %v1021, 0
    %v1044 = vsel %vm163, %v1023, 0
    %v1046 = vsel %vm163, %v1025, 0
    %v1048 = vsel %vm163, %v1027, 0
    %v1050 = vsel %vm163, %v1029, 0
    %v1052 = vsel %vm163, %v1031, 0
    %1054 = vmatprep.subr.mxu0 0.0
    %1055 = vmatpush1.xpose.msra.mxu0 %v1038
    %1056 = vmatprep.subr.mxu0 0.0
    %1057 = vmatpush1.xpose.msra.mxu0 %v1040
    %1058 = vmatprep.subr.mxu0 0.0
    %1059 = vmatpush1.xpose.msra.mxu0 %v1042
    %1060 = vmatprep.subr.mxu0 0.0
    %1061 = vmatpush1.xpose.msra.mxu0 %v1044
    %1062 = vmatprep.subr.mxu0 0.0
    %1063 = vmatpush1.xpose.msra.mxu0 %v1046
    %1064 = vmatprep.subr.mxu0 0.0
    %1065 = vmatpush1.xpose.msra.mxu0 %v1048
    %1066 = vmatprep.subr.mxu0 0.0
    %1067 = vmatpush1.xpose.msra.mxu0 %v1050
    %1068 = vmatprep.subr.mxu0 0.0
    %1069 = vmatpush1.xpose.msra.mxu0 %v1052
    %1070 = vmatprep.subr.mxu0 0.0
    %1071 = vmatpush1.xpose.msra.mxu0 0.0
    %1072 = vmatprep.subr.mxu0 0.0
    %1073 = vmatpush1.xpose.msra.mxu0 0.0
    %1074 = vmatprep.subr.mxu0 0.0
    %1075 = vmatpush1.xpose.msra.mxu0 0.0
    %1076 = vmatprep.subr.mxu0 0.0
    %1077 = vmatpush1.xpose.msra.mxu0 0.0
    %1078 = vmatprep.subr.mxu0 0.0
    %1079 = vmatpush1.xpose.msra.mxu0 0.0
    %1080 = vmatprep.subr.mxu0 0.0
    %1081 = vmatpush1.xpose.msra.mxu0 0.0
    %1082 = vmatprep.subr.mxu0 0.0
    %1083 = vmatpush1.xpose.msra.mxu0 0.0
    %1084 = vmatprep.subr.mxu0 0.0
    %1085 = vmatpush1.xpose.msra.mxu0 0.0
    %1086 = vmatprep.subr.mxu0 0.0
    %1087 = vmatpush1.xpose.msra.mxu0 0.0
    %1088 = vmatprep.subr.mxu0 0.0
    %1089 = vmatpush1.xpose.msra.mxu0 0.0
    %1090 = vmatprep.subr.mxu0 0.0
    %1091 = vmatpush1.xpose.msra.mxu0 0.0
    %1092 = vmatprep.subr.mxu0 0.0
    %1093 = vmatpush1.xpose.msra.mxu0 0.0
    %1094 = vmatprep.subr.mxu0 0.0
    %1095 = vmatpush1.xpose.msra.mxu0 0.0
    %1096 = vmatprep.subr.mxu0 0.0
    %1097 = vmatpush1.xpose.msra.mxu0 0.0
    %1098 = vmatprep.subr.mxu0 0.0
    %1099 = vmatpush1.xpose.msra.mxu0 0.0
    %1100 = vmatprep.subr.mxu0 0.0
    %1101 = vmatpush1.xpose.msra.mxu0 0.0
    %1102 = vmatprep.subr.mxu0 0.0
    %1103 = vmatpush1.xpose.msra.mxu0 0.0
    %1104 = vmatprep.subr.mxu0 0.0
    %1105 = vmatpush1.xpose.msra.mxu0 0.0
    %1106 = vmatprep.subr.mxu0 0.0
    %1107 = vmatpush1.xpose.msra.mxu0 0.0
    %1108 = vmatprep.subr.mxu0 0.0
    %1109 = vmatpush1.xpose.msra.mxu0 0.0
    %1110 = vmatprep.subr.mxu0 0.0
    %1111 = vmatpush1.xpose.msra.mxu0 0.0
    %1112 = vmatprep.subr.mxu0 0.0
    %1113 = vmatpush1.xpose.msra.mxu0 0.0
    %1114 = vmatprep.subr.mxu0 0.0
    %1115 = vmatpush1.xpose.msra.mxu0 0.0
    %1116 = vmatprep.subr.mxu0 0.0
    %1117 = vmatpush1.xpose.msra.mxu0 0.0
    %1118 = vmatprep.mubr.f32.mxu0 0.0
    %1119 = vmatmul.mubr.f32.gmra.mrb[0].mxu0 %v1033
    %v1120 = vpop.f32.mrb[0].mxu0
    %v1121 = vadd.f32 %v754, %v1120
    %v1122 = vpop.f32.mrb[0].mxu0
    %1123 = vmatprep.mubr.f32.mxu0 0.0
    %1124 = vmatmul.mubr.f32.gmra.mrb[0].mxu0 %v1036
    %v1125 = vpop.f32.mrb[0].mxu0
    %v1126 = vadd.f32 %v755, %v1125
    %v1127 = vpop.f32.mrb[0].mxu0
    %1128 = vdwg.mxu0
    %v1129 = vsel %vm446, %v1121, -inf
    %1130 = vmax.xlane.f32.xlu0 %v1129
    %v1131 = vpop.xlane.xlu0 %1130
    %v1132 = vsel %vm446, %v1126, -inf
    %1133 = vmax.xlane.f32.xlu0 %v1132
    %v1134 = vpop.xlane.xlu0 %1133
    %v1135 = vsub.f32 %v1121, %v1131
    %v1136 = vsub.f32 %v1126, %v1134
    %v1137 = vmul.f32 %v1135, 1.442695
    %v1138 = vpow.pop %v1137
    %v1139 = vmul.f32 %v1136, 1.442695
    %v1140 = vpow.pop %v1139
    %v1142 = vsel %vm446, %v1138, 0
    %v1145 = vsel %vm446, %v1140, 0
    %1147 = vmatprep.subr.mxu0 0.0
    %1148 = vmatpush1.msra.mxu0 %v746
    %1149 = vmatprep.subr.mxu0 0.0
    %1150 = vmatpush1.msra.mxu0 %v747
    %1151 = vmatprep.subr.mxu0 0.0
    %1152 = vmatpush1.msra.mxu0 %v748
    %1153 = vmatprep.subr.mxu0 0.0
    %1154 = vmatpush1.msra.mxu0 %v749
    %1155 = vmatprep.subr.mxu0 0.0
    %1156 = vmatpush1.msra.mxu0 %v750
    %1157 = vmatprep.subr.mxu0 0.0
    %1158 = vmatpush1.msra.mxu0 %v751
    %1159 = vmatprep.subr.mxu0 0.0
    %1160 = vmatpush1.msra.mxu0 %v752
    %1161 = vmatprep.subr.mxu0 0.0
    %1162 = vmatpush1.msra.mxu0 %v753
    %1163 = vmatprep.subr.mxu0 0.0
    %1164 = vmatpush1.msra.mxu0 0.0
    %1165 = vmatprep.subr.mxu0 0.0
    %1166 = vmatpush1.msra.mxu0 0.0
    %1167 = vmatprep.subr.mxu0 0.0
    %1168 = vmatpush1.msra.mxu0 0.0
    %1169 = vmatprep.subr.mxu0 0.0
    %1170 = vmatpush1.msra.mxu0 0.0
    %1171 = vmatprep.subr.mxu0 0.0
    %1172 = vmatpush1.msra.mxu0 0.0
    %1173 = vmatprep.subr.mxu0 0.0
    %1174 = vmatpush1.msra.mxu0 0.0
    %1175 = vmatprep.subr.mxu0 0.0
    %1176 = vmatpush1.msra.mxu0 0.0
    %1177 = vmatprep.subr.mxu0 0.0
    %1178 = vmatpush1.msra.mxu0 0.0
    %1179 = vmatprep.subr.mxu0 0.0
    %1180 = vmatpush1.msra.mxu0 0.0
    %1181 = vmatprep.subr.mxu0 0.0
    %1182 = vmatpush1.msra.mxu0 0.0
    %1183 = vmatprep.subr.mxu0 0.0
    %1184 = vmatpush1.msra.mxu0 0.0
    %1185 = vmatprep.subr.mxu0 0.0
    %1186 = vmatpush1.msra.mxu0 0.0
    %1187 = vmatprep.subr.mxu0 0.0
    %1188 = vmatpush1.msra.mxu0 0.0
    %1189 = vmatprep.subr.mxu0 0.0
    %1190 = vmatpush1.msra.mxu0 0.0
    %1191 = vmatprep.subr.mxu0 0.0
    %1192 = vmatpush1.msra.mxu0 0.0
    %1193 = vmatprep.subr.mxu0 0.0
    %1194 = vmatpush1.msra.mxu0 0.0
    %1195 = vmatprep.subr.mxu0 0.0
    %1196 = vmatpush1.msra.mxu0 0.0
    %1197 = vmatprep.subr.mxu0 0.0
    %1198 = vmatpush1.msra.mxu0 0.0
    %1199 = vmatprep.subr.mxu0 0.0
    %1200 = vmatpush1.msra.mxu0 0.0
    %1201 = vmatprep.subr.mxu0 0.0
    %1202 = vmatpush1.msra.mxu0 0.0
    %1203 = vmatprep.subr.mxu0 0.0
    %1204 = vmatpush1.msra.mxu0 0.0
    %1205 = vmatprep.subr.mxu0 0.0
    %1206 = vmatpush1.msra.mxu0 0.0
    %1207 = vmatprep.subr.mxu0 0.0
    %1208 = vmatpush1.msra.mxu0 0.0
    %1209 = vmatprep.subr.mxu0 0.0
    %1210 = vmatpush1.msra.mxu0 0.0
    %1211 = vmatprep.mubr.f32.mxu0 0.0
    %1212 = vmatmul.mubr.f32.gmra.mrb[0].mxu0 %v1142
    %v1213 = vpop.f32.mrb[0].mxu0
    %v1214 = vadd.f32 0.0, %v1213
    %v1215 = vpop.f32.mrb[0].mxu0
    %1216 = vmatprep.mubr.f32.mxu0 0.0
    %1217 = vmatmul.mubr.f32.gmra.mrb[0].mxu0 %v1145
    %v1218 = vpop.f32.mrb[0].mxu0
    %v1219 = vadd.f32 0.0, %v1218
    %v1220 = vpop.f32.mrb[0].mxu0
    %1221 = vdwg.mxu0
    %1230 = vrot.lane.b32.xlu0 %v1000, 64
    %v1231 = vpop.permute.xlu0 %1230
    %1232 = vrot.lane.b32.xlu0 %v1001, 64
    %v1233 = vpop.permute.xlu0 %1232
    %1234 = vrot.lane.b32.xlu0 %v1002, 64
    %v1235 = vpop.permute.xlu0 %1234
    %1236 = vrot.lane.b32.xlu0 %v1003, 64
    %v1237 = vpop.permute.xlu0 %1236
    %1238 = vrot.lane.b32.xlu0 %v1004, 64
    %v1239 = vpop.permute.xlu0 %1238
    %1240 = vrot.lane.b32.xlu0 %v1005, 64
    %v1241 = vpop.permute.xlu0 %1240
    %1242 = vrot.lane.b32.xlu0 %v1006, 64
    %v1243 = vpop.permute.xlu0 %1242
    %1244 = vrot.lane.b32.xlu0 %v1007, 64
    %v1245 = vpop.permute.xlu0 %1244
    %1254 = vmatprep.subr.mxu0 0.0
    %1255 = vmatpush1.msra.mxu0 %v1231
    %1256 = vmatprep.subr.mxu0 0.0
    %1257 = vmatpush1.msra.mxu0 %v1233
    %1258 = vmatprep.subr.mxu0 0.0
    %1259 = vmatpush1.msra.mxu0 %v1235
    %1260 = vmatprep.subr.mxu0 0.0
    %1261 = vmatpush1.msra.mxu0 %v1237
    %1262 = vmatprep.subr.mxu0 0.0
    %1263 = vmatpush1.msra.mxu0 %v1239
    %1264 = vmatprep.subr.mxu0 0.0
    %1265 = vmatpush1.msra.mxu0 %v1241
    %1266 = vmatprep.subr.mxu0 0.0
    %1267 = vmatpush1.msra.mxu0 %v1243
    %1268 = vmatprep.subr.mxu0 0.0
    %1269 = vmatpush1.msra.mxu0 %v1245
    %1270 = vmatprep.subr.mxu0 0.0
    %1271 = vmatpush1.msra.mxu0 0.0
    %1272 = vmatprep.subr.mxu0 0.0
    %1273 = vmatpush1.msra.mxu0 0.0
    %1274 = vmatprep.subr.mxu0 0.0
    %1275 = vmatpush1.msra.mxu0 0.0
    %1276 = vmatprep.subr.mxu0 0.0
    %1277 = vmatpush1.msra.mxu0 0.0
    %1278 = vmatprep.subr.mxu0 0.0
    %1279 = vmatpush1.msra.mxu0 0.0
    %1280 = vmatprep.subr.mxu0 0.0
    %1281 = vmatpush1.msra.mxu0 0.0
    %1282 = vmatprep.subr.mxu0 0.0
    %1283 = vmatpush1.msra.mxu0 0.0
    %1284 = vmatprep.subr.mxu0 0.0
    %1285 = vmatpush1.msra.mxu0 0.0
    %1286 = vmatprep.subr.mxu0 0.0
    %1287 = vmatpush1.msra.mxu0 0.0
    %1288 = vmatprep.subr.mxu0 0.0
    %1289 = vmatpush1.msra.mxu0 0.0
    %1290 = vmatprep.subr.mxu0 0.0
    %1291 = vmatpush1.msra.mxu0 0.0
    %1292 = vmatprep.subr.mxu0 0.0
    %1293 = vmatpush1.msra.mxu0 0.0
    %1294 = vmatprep.subr.mxu0 0.0
    %1295 = vmatpush1.msra.mxu0 0.0
    %1296 = vmatprep.subr.mxu0 0.0
    %1297 = vmatpush1.msra.mxu0 0.0
    %1298 = vmatprep.subr.mxu0 0.0
    %1299 = vmatpush1.msra.mxu0 0.0
    %1300 = vmatprep.subr.mxu0 0.0
    %1301 = vmatpush1.msra.mxu0 0.0
    %1302 = vmatprep.subr.mxu0 0.0
    %1303 = vmatpush1.msra.mxu0 0.0
    %1304 = vmatprep.subr.mxu0 0.0
    %1305 = vmatpush1.msra.mxu0 0.0
    %1306 = vmatprep.subr.mxu0 0.0
    %1307 = vmatpush1.msra.mxu0 0.0
    %1308 = vmatprep.subr.mxu0 0.0
    %1309 = vmatpush1.msra.mxu0 0.0
    %1310 = vmatprep.subr.mxu0 0.0
    %1311 = vmatpush1.msra.mxu0 0.0
    %1312 = vmatprep.subr.mxu0 0.0
    %1313 = vmatpush1.msra.mxu0 0.0
    %1314 = vmatprep.subr.mxu0 0.0
    %1315 = vmatpush1.msra.mxu0 0.0
    %1316 = vmatprep.subr.mxu0 0.0
    %1317 = vmatpush1.msra.mxu0 0.0
    %1318 = vmatprep.mubr.f32.mxu0 0.0
    %1319 = vmatmul.mubr.f32.gmra.mrb[0].mxu0 %v1142
    %v1320 = vpop.f32.mrb[0].mxu0
    %v1321 = vadd.f32 0.0, %v1320
    %v1322 = vpop.f32.mrb[0].mxu0
    %1323 = vmatprep.mubr.f32.mxu0 0.0
    %1324 = vmatmul.mubr.f32.gmra.mrb[0].mxu0 %v1145
    %v1325 = vpop.f32.mrb[0].mxu0
    %v1326 = vadd.f32 0.0, %v1325
    %v1327 = vpop.f32.mrb[0].mxu0
    %1328 = vdwg.mxu0
    %v1329 = vrcp.pop %v1214
    %v1330 = vrcp.pop %v1219
    %v1331 = vmul.f32 %v1214, %v1329
    %v1332 = vmul.f32 %v1219, %v1330
    %v1333 = vsub.f32 2.0, %v1331
    %v1334 = vsub.f32 2.0, %v1332
    %v1335 = vmul.f32 %v1329, %v1333
    %v1336 = vmul.f32 %v1330, %v1334
    %v1337 = vmul.f32 %v1321, %v1335
    %v1338 = vmul.f32 %v1326, %v1336
    %v1340 = vlaneseq
    %v1341 = vshrl.u32 %v1340, 7
    %v1342 = vsub.s32 0, %v1341
    %v1343 = vrot.slane %v765, %v1342
    %v1346 = vsel %vm163, %v1337, 0
    %v1349 = vsel %vm163, %v1338, 0
    %1351 = vmatprep.subr.mxu0 0.0
    %1352 = vmatpush1.msra.mxu0 %v761
    %1353 = vmatprep.subr.mxu0 0.0
    %1354 = vmatpush1.msra.mxu0 %v762
    %1355 = vmatprep.subr.mxu0 0.0
    %1356 = vmatpush1.msra.mxu0 %v763
    %1357 = vmatprep.subr.mxu0 0.0
    %1358 = vmatpush1.msra.mxu0 %v764
    %1359 = vmatprep.subr.mxu0 0.0
    %1360 = vmatpush1.msra.mxu0 0.0
    %1361 = vmatprep.subr.mxu0 0.0
    %1362 = vmatpush1.msra.mxu0 0.0
    %1363 = vmatprep.subr.mxu0 0.0
    %1364 = vmatpush1.msra.mxu0 0.0
    %1365 = vmatprep.subr.mxu0 0.0
    %1366 = vmatpush1.msra.mxu0 0.0
    %1367 = vmatprep.subr.mxu0 0.0
    %1368 = vmatpush1.msra.mxu0 0.0
    %1369 = vmatprep.subr.mxu0 0.0
    %1370 = vmatpush1.msra.mxu0 0.0
    %1371 = vmatprep.subr.mxu0 0.0
    %1372 = vmatpush1.msra.mxu0 0.0
    %1373 = vmatprep.subr.mxu0 0.0
    %1374 = vmatpush1.msra.mxu0 0.0
    %1375 = vmatprep.subr.mxu0 0.0
    %1376 = vmatpush1.msra.mxu0 0.0
    %1377 = vmatprep.subr.mxu0 0.0
    %1378 = vmatpush1.msra.mxu0 0.0
    %1379 = vmatprep.subr.mxu0 0.0
    %1380 = vmatpush1.msra.mxu0 0.0
    %1381 = vmatprep.subr.mxu0 0.0
    %1382 = vmatpush1.msra.mxu0 0.0
    %1383 = vmatprep.subr.mxu0 0.0
    %1384 = vmatpush1.msra.mxu0 0.0
    %1385 = vmatprep.subr.mxu0 0.0
    %1386 = vmatpush1.msra.mxu0 0.0
    %1387 = vmatprep.subr.mxu0 0.0
    %1388 = vmatpush1.msra.mxu0 0.0
    %1389 = vmatprep.subr.mxu0 0.0
    %1390 = vmatpush1.msra.mxu0 0.0
    %1391 = vmatprep.subr.mxu0 0.0
    %1392 = vmatpush1.msra.mxu0 0.0
    %1393 = vmatprep.subr.mxu0 0.0
    %1394 = vmatpush1.msra.mxu0 0.0
    %1395 = vmatprep.subr.mxu0 0.0
    %1396 = vmatpush1.msra.mxu0 0.0
    %1397 = vmatprep.subr.mxu0 0.0
    %1398 = vmatpush1.msra.mxu0 0.0
    %1399 = vmatprep.subr.mxu0 0.0
    %1400 = vmatpush1.msra.mxu0 0.0
    %1401 = vmatprep.subr.mxu0 0.0
    %1402 = vmatpush1.msra.mxu0 0.0
    %1403 = vmatprep.subr.mxu0 0.0
    %1404 = vmatpush1.msra.mxu0 0.0
    %1405 = vmatprep.subr.mxu0 0.0
    %1406 = vmatpush1.msra.mxu0 0.0
    %1407 = vmatprep.subr.mxu0 0.0
    %1408 = vmatpush1.msra.mxu0 0.0
    %1409 = vmatprep.subr.mxu0 0.0
    %1410 = vmatpush1.msra.mxu0 0.0
    %1411 = vmatprep.subr.mxu0 0.0
    %1412 = vmatpush1.msra.mxu0 0.0
    %1413 = vmatprep.subr.mxu0 0.0
    %1414 = vmatpush1.msra.mxu0 0.0
    %1415 = vmatprep.mubr.f32.mxu0 0.0
    %1416 = vmatmul.mubr.f32.gmra.mrb[0].mxu0 %v1346
    %v1417 = vpop.f32.mrb[0].mxu0
    %v1418 = vadd.f32 %v1343, %v1417
    %v1419 = vpop.f32.mrb[0].mxu0
    %1420 = vmatprep.mubr.f32.mxu0 0.0
    %1421 = vmatmul.mubr.f32.gmra.mrb[0].mxu0 %v1349
    %v1422 = vpop.f32.mrb[0].mxu0
    %v1423 = vadd.f32 %v1343, %v1422
    %v1424 = vpop.f32.mrb[0].mxu0
    %1425 = vdwg.mxu0
    %v1426 = vadd.f32 %v744, %v1418
    %v1427 = vadd.f32 %v745, %v1423
    %v1428 = vld [vmem:[%s10] sm:$0xff]
    %v1429 = vld [vmem:[%s10 + $0x8] sm:$0xff]
    %v1430 = vld [vmem:[%s10 + $0x10] sm:$0xff]
    %v1431 = vld [vmem:[%s10 + $0x18] sm:$0xff]
    %v1432 = vld [vmem:[#allocation13] sm:$0x1]
    %v1434 = vlaneseq
    %v1435 = vshrl.u32 %v1434, 7
    %v1436 = vsub.s32 0, %v1435
    %v1437 = vrot.slane %v1432, %v1436
    %v1440 = vsel %vm163, %v1426, 0
    %v1443 = vsel %vm163, %v1427, 0
    %1445 = vmatprep.subr.mxu0 0.0
    %1446 = vmatpush1.msra.mxu0 %v1428
    %1447 = vmatprep.subr.mxu0 0.0
    %1448 = vmatpush1.msra.mxu0 %v1429
    %1449 = vmatprep.subr.mxu0 0.0
    %1450 = vmatpush1.msra.mxu0 %v1430
    %1451 = vmatprep.subr.mxu0 0.0
    %1452 = vmatpush1.msra.mxu0 %v1431
    %1453 = vmatprep.subr.mxu0 0.0
    %1454 = vmatpush1.msra.mxu0 0.0
    %1455 = vmatprep.subr.mxu0 0.0
    %1456 = vmatpush1.msra.mxu0 0.0
    %1457 = vmatprep.subr.mxu0 0.0
    %1458 = vmatpush1.msra.mxu0 0.0
    %1459 = vmatprep.subr.mxu0 0.0
    %1460 = vmatpush1.msra.mxu0 0.0
    %1461 = vmatprep.subr.mxu0 0.0
    %1462 = vmatpush1.msra.mxu0 0.0
    %1463 = vmatprep.subr.mxu0 0.0
    %1464 = vmatpush1.msra.mxu0 0.0
    %1465 = vmatprep.subr.mxu0 0.0
    %1466 = vmatpush1.msra.mxu0 0.0
    %1467 = vmatprep.subr.mxu0 0.0
    %1468 = vmatpush1.msra.mxu0 0.0
    %1469 = vmatprep.subr.mxu0 0.0
    %1470 = vmatpush1.msra.mxu0 0.0
    %1471 = vmatprep.subr.mxu0 0.0
    %1472 = vmatpush1.msra.mxu0 0.0
    %1473 = vmatprep.subr.mxu0 0.0
    %1474 = vmatpush1.msra.mxu0 0.0
    %1475 = vmatprep.subr.mxu0 0.0
    %1476 = vmatpush1.msra.mxu0 0.0
    %1477 = vmatprep.subr.mxu0 0.0
    %1478 = vmatpush1.msra.mxu0 0.0
    %1479 = vmatprep.subr.mxu0 0.0
    %1480 = vmatpush1.msra.mxu0 0.0
    %1481 = vmatprep.subr.mxu0 0.0
    %1482 = vmatpush1.msra.mxu0 0.0
    %1483 = vmatprep.subr.mxu0 0.0
    %1484 = vmatpush1.msra.mxu0 0.0
    %1485 = vmatprep.subr.mxu0 0.0
    %1486 = vmatpush1.msra.mxu0 0.0
    %1487 = vmatprep.subr.mxu0 0.0
    %1488 = vmatpush1.msra.mxu0 0.0
    %1489 = vmatprep.subr.mxu0 0.0
    %1490 = vmatpush1.msra.mxu0 0.0
    %1491 = vmatprep.subr.mxu0 0.0
    %1492 = vmatpush1.msra.mxu0 0.0
    %1493 = vmatprep.subr.mxu0 0.0
    %1494 = vmatpush1.msra.mxu0 0.0
    %1495 = vmatprep.subr.mxu0 0.0
    %1496 = vmatpush1.msra.mxu0 0.0
    %1497 = vmatprep.subr.mxu0 0.0
    %1498 = vmatpush1.msra.mxu0 0.0
    %1499 = vmatprep.subr.mxu0 0.0
    %1500 = vmatpush1.msra.mxu0 0.0
    %1501 = vmatprep.subr.mxu0 0.0
    %1502 = vmatpush1.msra.mxu0 0.0
    %1503 = vmatprep.subr.mxu0 0.0
    %1504 = vmatpush1.msra.mxu0 0.0
    %1505 = vmatprep.subr.mxu0 0.0
    %1506 = vmatpush1.msra.mxu0 0.0
    %1507 = vmatprep.subr.mxu0 0.0
    %1508 = vmatpush1.msra.mxu0 0.0
    %1509 = vmatprep.mubr.f32.mxu0 0.0
    %1510 = vmatmul.mubr.f32.gmra.mrb[0].mxu0 %v1440
    %v1511 = vpop.f32.mrb[0].mxu0
    %v1512 = vadd.f32 %v1437, %v1511
    %v1513 = vpop.f32.mrb[0].mxu0
    %1514 = vmatprep.mubr.f32.mxu0 0.0
    %1515 = vmatmul.mubr.f32.gmra.mrb[0].mxu0 %v1443
    %v1516 = vpop.f32.mrb[0].mxu0
    %v1517 = vadd.f32 %v1437, %v1516
    %v1518 = vpop.f32.mrb[0].mxu0
    %1519 = vdwg.mxu0
    %v1520 = vadd.f32 %v1426, %v1512
    %v1521 = vadd.f32 %v1427, %v1517
    %1522 = vst.msk [vmem:[#allocation14] sm:$0xff] %vm163, %v1520
    %1523 = vst.msk [vmem:[#allocation14 + $0x8] sm:$0xff] %vm163, %v1521
    // Predicated region
    $region94: #{transformer_decoder_layer.1} parent=1 // pred_check
      _
    $region95: #{transformer_decoder_layer.1} parent=1 // pred_check_branch
      %1525 = sbr.rel (0) target = $region97
    $region96: #{transformer_decoder_layer.1} parent=1 // pred_region
      %s1527 = ssub.s32 256, 256
      %1528 = vsyncadd [#allocation4], %s1527
      %s1529 = sshll.u32 [#allocation14], 4
      %s1530 = int_to_ptr.vmem [resolvable:$true] %s1529
      %1535 = dma.vmem_to_hbm [thread:$0]  %s1530, 256, %s16, [#allocation4], 128, 128, 8
    $region97: #{transformer_decoder_layer.1} parent=1 // pred_fallthru
      _
    // Predicated region
    $region98: #{transformer_decoder_layer.1} parent=1 // pred_check
      _
    $region99: #{transformer_decoder_layer.1} parent=1 // pred_check_branch
      %1537 = sbr.rel (0) target = $region101
    $region100: #{transformer_decoder_layer.1} parent=1 // pred_region
      %1538 = dma.done [#allocation4], 256
    $region101: #{transformer_decoder_layer.1} parent=1 // pred_fallthru
      _
    %1539 = vsyncpa [#allocation3], 1
    %1540 = vsyncpa [#allocation6], 1
    %1541 = vsyncpa [#allocation9], 1
    %1542 = vsyncpa [#allocation12], 1
    %1543 = vsyncpa [#allocation4], 1

</llo_original>
